<compile_context>
chip_gen: v5e
topology: v5e:2x2
jax: 0.10.0
libtpu: 0.0.40
codegen_flags: <defaults>
</compile_context>

<pallas_src>
import functools

import jax
import jax.numpy as jnp
from jax.experimental import pallas as pl
from jax.experimental.pallas import tpu as pltpu


def _layer_norm(x, gamma, beta, eps=1e-5):
    # one-pass mean/variance (E[x], E[x^2]) -> half the cross-lane reductions
    mu = jnp.mean(x, axis=-1, keepdims=True)
    ex2 = jnp.mean(x * x, axis=-1, keepdims=True)
    var = ex2 - mu * mu
    return (x - mu) * jax.lax.rsqrt(var + eps) * gamma + beta


def encoder_layer_kernel(n_heads, tq, mm_dtype,
                         x_ref, mask_ref,
                         g1_ref, be1_ref,
                         wq_ref, bq_ref, wkv_ref, bkv_ref,
                         wo_ref, bo_ref,
                         g2_ref, be2_ref,
                         w1_ref, b1_ref, w2_ref, b2_ref,
                         o_ref, attn_scr):
    x = x_ref[0]                                  # (S, D)
    S, D = x.shape
    H = n_heads
    Dh = D // H
    scale = 1.0 / float(Dh) ** 0.5

    def mm(a, b):                                 # MXU matmul, f32 accumulate
        if mm_dtype is not None:
            a = a.astype(mm_dtype)
            b = b.astype(mm_dtype)
        return jnp.dot(a, b, preferred_element_type=jnp.float32)

    def bmm(eq, a, b):                            # single batched-over-heads matmul
        if mm_dtype is not None:
            a = a.astype(mm_dtype)
            b = b.astype(mm_dtype)
        return jnp.einsum(eq, a, b, preferred_element_type=jnp.float32)

    g1 = g1_ref[0]
    be1 = be1_ref[0]

    # ---- K/V over the full sequence: LN1 + fused (D, 2D) projection ------
    xn = _layer_norm(x, g1, be1)
    kv = mm(xn, wkv_ref[...]) + bkv_ref[0]        # (S, 2D) in one MXU pass
    k = kv[:, :D]
    v = kv[:, D:]

    # ---- Q over this query tile (1/sqrt(Dh) folded into q) ---------------
    if tq == S:                                   # static: single query tile
        x_q, xn_q = x, xn
    else:
        q0 = pl.multiple_of(pl.program_id(1) * tq, tq)
        x_q = x_ref[0, pl.ds(q0, tq), :]          # (TQ, D)
        xn_q = _layer_norm(x_q, g1, be1)
    q = (mm(xn_q, wq_ref[...]) + bq_ref[0]) * scale     # (TQ, D)

    # ---- batched multi-head attention (no per-head matmul loop) ----------
    qs = jnp.stack([q[:, h * Dh:(h + 1) * Dh] for h in range(H)], axis=0)  # (H,TQ,Dh)
    ks = jnp.stack([k[:, h * Dh:(h + 1) * Dh] for h in range(H)], axis=0)  # (H,S,Dh)
    vs = jnp.stack([v[:, h * Dh:(h + 1) * Dh] for h in range(H)], axis=0)  # (H,S,Dh)

    scores = bmm('hqd,hkd->hqk', qs, ks)                  # (H, TQ, S)
    mask_b = (mask_ref[0] > 0)[None]                      # (1, 1, S), once
    scores = jnp.where(mask_b, scores, jnp.float32(-1e9))
    scores = scores - jnp.max(scores, axis=-1, keepdims=True)
    p = jnp.exp(scores)
    p = p * pl.reciprocal(jnp.sum(p, axis=-1, keepdims=True), approx=True)
    ctx = bmm('hqk,hkd->hqd', p, vs)                      # (H, TQ, Dh)

    for h in range(H):                            # write heads into VMEM slab
        attn_scr[:, h * Dh:(h + 1) * Dh] = ctx[h]
    attn = mm(attn_scr[...], wo_ref[...]) + bo_ref[0]     # (TQ, D)
    x1 = x_q + attn                               # dropout == identity (eval)

    # ---- position-wise FFN on this query tile -----------------------------
    x1n = _layer_norm(x1, g2_ref[0], be2_ref[0])
    h1 = jnp.maximum(mm(x1n, w1_ref[...]) + b1_ref[0], 0.0)
    ff = mm(h1, w2_ref[...]) + b2_ref[0]
    o_ref[0] = (x1 + ff).astype(o_ref.dtype)


def encoder_layer(x, mask, params, n_heads, matmul_dtype=None):
    B, S, D = x.shape
    Dff = params["w1"].shape[1]

    # query-tile the sequence; full sequence for short S
    TQ = 256 if (S > 256 and S % 256 == 0) else S
    NQ = S // TQ

    # fuse K and V projection weights -> one MXU pass over LN1(x)
    wkv = jnp.concatenate([params["wk"], params["wv"]], axis=1)   # (D, 2D)
    bkv = jnp.concatenate([params["bk"], params["bv"]], axis=1)   # (1, 2D)

    def fixed(shape):
        return pl.BlockSpec(shape, lambda b, q: (0,) * len(shape))

    in_specs = [
        pl.BlockSpec((1, S, D), lambda b, q: (b, 0, 0)),   # x (full sequence)
        pl.BlockSpec((1, 1, S), lambda b, q: (b, 0, 0)),   # mask
        fixed((1, D)), fixed((1, D)),                      # LN1 gamma/beta
        fixed((D, D)), fixed((1, D)),                      # Wq, bq
        fixed((D, 2 * D)), fixed((1, 2 * D)),              # fused Wkv, bkv
        fixed((D, D)), fixed((1, D)),                      # Wo, bo
        fixed((1, D)), fixed((1, D)),                      # LN2 gamma/beta
        fixed((D, Dff)), fixed((1, Dff)),                  # W1, b1
        fixed((Dff, D)), fixed((1, D)),                    # W2, b2
    ]

    flops = (2 * B * S * D * 3 * D          # QKV projections
             + 2 * B * S * S * D * 2        # scores + context
             + 2 * B * S * D * D            # output projection
             + 2 * B * S * D * Dff * 2)     # FFN
    transcendentals = B * n_heads * S * S + 4 * B * S       # softmax exp + LN rsqrt
    bytes_accessed = 4 * (2 * B * S * D + B * S
                          + 4 * D * D + 2 * D * Dff + 6 * D + Dff)

    return pl.pallas_call(
        functools.partial(encoder_layer_kernel, n_heads, TQ, matmul_dtype),
        out_shape=jax.ShapeDtypeStruct((B, S, D), x.dtype),
        grid_spec=pltpu.PrefetchScalarGridSpec(
            num_scalar_prefetch=0,
            grid=(B, NQ),
            in_specs=in_specs,
            out_specs=pl.BlockSpec((1, TQ, D), lambda b, q: (b, q, 0)),
            scratch_shapes=[pltpu.VMEM((TQ, D), jnp.float32)],
        ),
        compiler_params=pltpu.CompilerParams(
            dimension_semantics=("parallel", "parallel"),
            vmem_limit_bytes=64 * 1024 * 1024),
        cost_estimate=pl.CostEstimate(
            flops=flops, transcendentals=transcendentals,
            bytes_accessed=bytes_accessed),
    )(x, mask,
      params["g1"], params["be1"],
      params["wq"], params["bq"],
      wkv, bkv,
      params["wo"], params["bo"],
      params["g2"], params["be2"],
      params["w1"], params["b1"],
      params["w2"], params["b2"])


def reference(x, mask, params, n_heads):
    B, S, D = x.shape
    Dh = D // n_heads

    def ln(v, g, b):
        mu = jnp.mean(v, -1, keepdims=True)
        var = jnp.mean((v - mu) ** 2, -1, keepdims=True)
        return (v - mu) * jax.lax.rsqrt(var + 1e-5) * g + b

    xn = ln(x, params["g1"][0], params["be1"][0])
    q = xn @ params["wq"] + params["bq"][0]
    k = xn @ params["wk"] + params["bk"][0]
    v = xn @ params["wv"] + params["bv"][0]
    q = q.reshape(B, S, n_heads, Dh).transpose(0, 2, 1, 3)
    k = k.reshape(B, S, n_heads, Dh).transpose(0, 2, 1, 3)
    v = v.reshape(B, S, n_heads, Dh).transpose(0, 2, 1, 3)
    scores = jnp.einsum("bhqd,bhkd->bhqk", q, k) / jnp.sqrt(jnp.float32(Dh))
    scores = jnp.where(mask[:, None, :, :] > 0, scores, -1e9)
    p = jax.nn.softmax(scores, axis=-1)
    attn = jnp.einsum("bhqk,bhkd->bhqd", p, v).transpose(0, 2, 1, 3).reshape(B, S, D)
    x1 = x + attn @ params["wo"] + params["bo"][0]
    x1n = ln(x1, params["g2"][0], params["be2"][0])
    ff = jnp.maximum(x1n @ params["w1"] + params["b1"][0], 0.0) @ params["w2"] + params["b2"][0]
    return x1 + ff


if __name__ == "__main__":
    B, S, D, H, Dff = 2, 8, 32, 4, 64
    key = jax.random.PRNGKey(0)
    keys = jax.random.split(key, 10)

    def w(k, shape, scale):
        return jax.random.normal(k, shape, jnp.float32) * scale

    params = {
        "g1": jnp.ones((1, D), jnp.float32),
        "be1": jnp.zeros((1, D), jnp.float32),
        "wq": w(keys[0], (D, D), 0.1), "bq": jnp.zeros((1, D), jnp.float32),
        "wk": w(keys[1], (D, D), 0.1), "bk": jnp.zeros((1, D), jnp.float32),
        "wv": w(keys[2], (D, D), 0.1), "bv": jnp.zeros((1, D), jnp.float32),
        "wo": w(keys[3], (D, D), 0.1), "bo": jnp.zeros((1, D), jnp.float32),
        "g2": jnp.ones((1, D), jnp.float32),
        "be2": jnp.zeros((1, D), jnp.float32),
        "w1": w(keys[4], (D, Dff), 0.1), "b1": jnp.zeros((1, Dff), jnp.float32),
        "w2": w(keys[5], (Dff, D), 0.1), "b2": jnp.zeros((1, D), jnp.float32),
    }

    x = jax.random.normal(keys[6], (B, S, D), jnp.float32)
    lengths = jnp.array([S, 5], jnp.int32)
    mask = (jnp.arange(S)[None, :] < lengths[:, None]).astype(jnp.float32)[:, None, :]  # (B,1,S)

    # f32 compute here (v5e-safe, tight tolerance); pass matmul_dtype=jnp.bfloat16
    # on v6e/v7x for full MXU throughput (looser tolerance expected).
    out = encoder_layer(x, mask, params, H, matmul_dtype=None)
    out = jax.block_until_ready(out)

    ref = reference(x, mask, params, H)
    assert out.shape == (B, S, D)
    # tolerance slightly loosened vs. exact-divide version because the softmax
    # denominator uses the EUP approximate reciprocal.
    assert jnp.allclose(out, ref, atol=2e-3, rtol=2e-3), float(jnp.max(jnp.abs(out - ref)))

    print("KERNEL_OK")
</pallas_src>

<mosaic_0001>
module attributes {stable_mosaic.version = 11 : i64} {
  func.func @encoder_layer_kernel(%arg0: i32, %arg1: i32, %arg2: memref<1x8x32xf32, #tpu.memory_space<vmem>>, %arg3: memref<1x1x8xf32, #tpu.memory_space<vmem>>, %arg4: memref<1x32xf32, #tpu.memory_space<vmem>>, %arg5: memref<1x32xf32, #tpu.memory_space<vmem>>, %arg6: memref<32x32xf32, #tpu.memory_space<vmem>>, %arg7: memref<1x32xf32, #tpu.memory_space<vmem>>, %arg8: memref<32x64xf32, #tpu.memory_space<vmem>>, %arg9: memref<1x64xf32, #tpu.memory_space<vmem>>, %arg10: memref<32x32xf32, #tpu.memory_space<vmem>>, %arg11: memref<1x32xf32, #tpu.memory_space<vmem>>, %arg12: memref<1x32xf32, #tpu.memory_space<vmem>>, %arg13: memref<1x32xf32, #tpu.memory_space<vmem>>, %arg14: memref<32x64xf32, #tpu.memory_space<vmem>>, %arg15: memref<1x64xf32, #tpu.memory_space<vmem>>, %arg16: memref<64x32xf32, #tpu.memory_space<vmem>>, %arg17: memref<1x32xf32, #tpu.memory_space<vmem>>, %arg18: memref<1x8x32xf32, #tpu.memory_space<vmem>>, %arg19: memref<8x32xf32, #tpu.memory_space<vmem>>) attributes {dimension_semantics = [#tpu.dimension_semantics<parallel>, #tpu.dimension_semantics<parallel>], iteration_bounds = array<i64: 2, 1>, scalar_prefetch = 0 : i64, scratch_operands = 1 : i64, tpu.core_type = #tpu.core_type<tc>, window_params = [{transform_indices = @transform_0, window_bounds = array<i64: 1, 8, 32>}, {transform_indices = @transform_1, window_bounds = array<i64: 1, 1, 8>}, {pipeline_mode = #tpu.pipeline_mode<synchronous>, transform_indices = @transform_2, window_bounds = array<i64: 1, 32>}, {pipeline_mode = #tpu.pipeline_mode<synchronous>, transform_indices = @transform_3, window_bounds = array<i64: 1, 32>}, {pipeline_mode = #tpu.pipeline_mode<synchronous>, transform_indices = @transform_4, window_bounds = array<i64: 32, 32>}, {pipeline_mode = #tpu.pipeline_mode<synchronous>, transform_indices = @transform_5, window_bounds = array<i64: 1, 32>}, {pipeline_mode = #tpu.pipeline_mode<synchronous>, transform_indices = @transform_6, window_bounds = array<i64: 32, 64>}, {pipeline_mode = #tpu.pipeline_mode<synchronous>, transform_indices = @transform_7, window_bounds = array<i64: 1, 64>}, {pipeline_mode = #tpu.pipeline_mode<synchronous>, transform_indices = @transform_8, window_bounds = array<i64: 32, 32>}, {pipeline_mode = #tpu.pipeline_mode<synchronous>, transform_indices = @transform_9, window_bounds = array<i64: 1, 32>}, {pipeline_mode = #tpu.pipeline_mode<synchronous>, transform_indices = @transform_10, window_bounds = array<i64: 1, 32>}, {pipeline_mode = #tpu.pipeline_mode<synchronous>, transform_indices = @transform_11, window_bounds = array<i64: 1, 32>}, {pipeline_mode = #tpu.pipeline_mode<synchronous>, transform_indices = @transform_12, window_bounds = array<i64: 32, 64>}, {pipeline_mode = #tpu.pipeline_mode<synchronous>, transform_indices = @transform_13, window_bounds = array<i64: 1, 64>}, {pipeline_mode = #tpu.pipeline_mode<synchronous>, transform_indices = @transform_14, window_bounds = array<i64: 64, 32>}, {pipeline_mode = #tpu.pipeline_mode<synchronous>, transform_indices = @transform_15, window_bounds = array<i64: 1, 32>}, {transform_indices = @transform_16, window_bounds = array<i64: 1, 8, 32>}]} {
    %c0 = arith.constant 0 : index
    %c0_0 = arith.constant 0 : index
    %c0_1 = arith.constant 0 : index
    %0 = vector.load %arg2[%c0, %c0_0, %c0_1] : memref<1x8x32xf32, #tpu.memory_space<vmem>>, vector<1x8x32xf32>
    %1 = vector.shape_cast %0 : vector<1x8x32xf32> to vector<8x32xf32>
    %c0_2 = arith.constant 0 : index
    %c0_3 = arith.constant 0 : index
    %2 = vector.load %arg4[%c0_2, %c0_3] : memref<1x32xf32, #tpu.memory_space<vmem>>, vector<1x32xf32>
    %3 = vector.shape_cast %2 : vector<1x32xf32> to vector<32xf32>
    %c0_4 = arith.constant 0 : index
    %c0_5 = arith.constant 0 : index
    %4 = vector.load %arg5[%c0_4, %c0_5] : memref<1x32xf32, #tpu.memory_space<vmem>>, vector<1x32xf32>
    %5 = vector.shape_cast %4 : vector<1x32xf32> to vector<32xf32>
    %cst = arith.constant dense<0.000000e+00> : vector<8xf32>
    %6 = vector.multi_reduction <add>, %1, %cst [1] : vector<8x32xf32> to vector<8xf32>
    %7 = vector.shape_cast %6 : vector<8xf32> to vector<8x1xf32>
    %cst_6 = arith.constant 3.200000e+01 : f32
    %8 = vector.broadcast %cst_6 : f32 to vector<8x1xf32>
    %9 = arith.divf %7, %8 : vector<8x1xf32>
    %10 = arith.mulf %1, %1 : vector<8x32xf32>
    %cst_7 = arith.constant dense<0.000000e+00> : vector<8xf32>
    %11 = vector.multi_reduction <add>, %10, %cst_7 [1] : vector<8x32xf32> to vector<8xf32>
    %12 = vector.shape_cast %11 : vector<8xf32> to vector<8x1xf32>
    %cst_8 = arith.constant 3.200000e+01 : f32
    %13 = vector.broadcast %cst_8 : f32 to vector<8x1xf32>
    %14 = arith.divf %12, %13 : vector<8x1xf32>
    %15 = arith.mulf %9, %9 : vector<8x1xf32>
    %16 = arith.subf %14, %15 : vector<8x1xf32>
    %17 = vector.broadcast %9 : vector<8x1xf32> to vector<8x32xf32>
    %18 = arith.subf %1, %17 : vector<8x32xf32>
    %cst_9 = arith.constant 9.99999974E-6 : f32
    %19 = vector.broadcast %cst_9 : f32 to vector<8x1xf32>
    %20 = arith.addf %16, %19 : vector<8x1xf32>
    %21 = math.rsqrt %20 : vector<8x1xf32>
    %22 = vector.broadcast %21 : vector<8x1xf32> to vector<8x32xf32>
    %23 = arith.mulf %18, %22 : vector<8x32xf32>
    %24 = vector.shape_cast %3 : vector<32xf32> to vector<1x32xf32>
    %25 = vector.broadcast %24 : vector<1x32xf32> to vector<8x32xf32>
    %26 = arith.mulf %23, %25 : vector<8x32xf32>
    %27 = vector.shape_cast %5 : vector<32xf32> to vector<1x32xf32>
    %28 = vector.broadcast %27 : vector<1x32xf32> to vector<8x32xf32>
    %29 = arith.addf %26, %28 : vector<8x32xf32>
    %c0_10 = arith.constant 0 : index
    %c0_11 = arith.constant 0 : index
    %30 = vector.load %arg8[%c0_10, %c0_11] : memref<32x64xf32, #tpu.memory_space<vmem>>, vector<32x64xf32>
    %cst_12 = arith.constant dense<0.000000e+00> : vector<8x64xf32>
    %31 = tpu.matmul %29, %30, %cst_12 {dimension_numbers = #tpu.dot_dimension_numbers<[1], [0], [0], [1], [0, 0, 1, 1], [], []>} : vector<8x32xf32>, vector<32x64xf32>, vector<8x64xf32> -> vector<8x64xf32>
    %c0_13 = arith.constant 0 : index
    %c0_14 = arith.constant 0 : index
    %32 = vector.load %arg9[%c0_13, %c0_14] : memref<1x64xf32, #tpu.memory_space<vmem>>, vector<1x64xf32>
    %33 = vector.shape_cast %32 : vector<1x64xf32> to vector<64xf32>
    %34 = vector.shape_cast %33 : vector<64xf32> to vector<1x64xf32>
    %35 = vector.broadcast %34 : vector<1x64xf32> to vector<8x64xf32>
    %36 = arith.addf %31, %35 : vector<8x64xf32>
    %37 = vector.extract_strided_slice %36 {offsets = [0, 0], sizes = [8, 32], strides = [1, 1]} : vector<8x64xf32> to vector<8x32xf32>
    %38 = vector.extract_strided_slice %36 {offsets = [0, 32], sizes = [8, 32], strides = [1, 1]} : vector<8x64xf32> to vector<8x32xf32>
    %c0_15 = arith.constant 0 : index
    %c0_16 = arith.constant 0 : index
    %39 = vector.load %arg6[%c0_15, %c0_16] : memref<32x32xf32, #tpu.memory_space<vmem>>, vector<32x32xf32>
    %cst_17 = arith.constant dense<0.000000e+00> : vector<8x32xf32>
    %40 = tpu.matmul %29, %39, %cst_17 {dimension_numbers = #tpu.dot_dimension_numbers<[1], [0], [0], [1], [0, 0, 1, 1], [], []>} : vector<8x32xf32>, vector<32x32xf32>, vector<8x32xf32> -> vector<8x32xf32>
    %c0_18 = arith.constant 0 : index
    %c0_19 = arith.constant 0 : index
    %41 = vector.load %arg7[%c0_18, %c0_19] : memref<1x32xf32, #tpu.memory_space<vmem>>, vector<1x32xf32>
    %42 = vector.shape_cast %41 : vector<1x32xf32> to vector<32xf32>
    %43 = vector.shape_cast %42 : vector<32xf32> to vector<1x32xf32>
    %44 = vector.broadcast %43 : vector<1x32xf32> to vector<8x32xf32>
    %45 = arith.addf %40, %44 : vector<8x32xf32>
    %cst_20 = arith.constant 0.353553385 : f32
    %46 = vector.broadcast %cst_20 : f32 to vector<8x32xf32>
    %47 = arith.mulf %45, %46 : vector<8x32xf32>
    %48 = vector.extract_strided_slice %47 {offsets = [0, 0], sizes = [8, 8], strides = [1, 1]} : vector<8x32xf32> to vector<8x8xf32>
    %49 = vector.extract_strided_slice %47 {offsets = [0, 8], sizes = [8, 8], strides = [1, 1]} : vector<8x32xf32> to vector<8x8xf32>
    %50 = vector.extract_strided_slice %47 {offsets = [0, 16], sizes = [8, 8], strides = [1, 1]} : vector<8x32xf32> to vector<8x8xf32>
    %51 = vector.extract_strided_slice %47 {offsets = [0, 24], sizes = [8, 8], strides = [1, 1]} : vector<8x32xf32> to vector<8x8xf32>
    %52 = vector.shape_cast %48 : vector<8x8xf32> to vector<1x8x8xf32>
    %53 = vector.shape_cast %49 : vector<8x8xf32> to vector<1x8x8xf32>
    %54 = vector.shape_cast %50 : vector<8x8xf32> to vector<1x8x8xf32>
    %55 = vector.shape_cast %51 : vector<8x8xf32> to vector<1x8x8xf32>
    %56 = tpu.concatenate %52, %53, %54, %55 in 0 : vector<1x8x8xf32>, vector<1x8x8xf32>, vector<1x8x8xf32>, vector<1x8x8xf32> -> vector<4x8x8xf32>
    %57 = vector.extract_strided_slice %37 {offsets = [0, 0], sizes = [8, 8], strides = [1, 1]} : vector<8x32xf32> to vector<8x8xf32>
    %58 = vector.extract_strided_slice %37 {offsets = [0, 8], sizes = [8, 8], strides = [1, 1]} : vector<8x32xf32> to vector<8x8xf32>
    %59 = vector.extract_strided_slice %37 {offsets = [0, 16], sizes = [8, 8], strides = [1, 1]} : vector<8x32xf32> to vector<8x8xf32>
    %60 = vector.extract_strided_slice %37 {offsets = [0, 24], sizes = [8, 8], strides = [1, 1]} : vector<8x32xf32> to vector<8x8xf32>
    %61 = vector.shape_cast %57 : vector<8x8xf32> to vector<1x8x8xf32>
    %62 = vector.shape_cast %58 : vector<8x8xf32> to vector<1x8x8xf32>
    %63 = vector.shape_cast %59 : vector<8x8xf32> to vector<1x8x8xf32>
    %64 = vector.shape_cast %60 : vector<8x8xf32> to vector<1x8x8xf32>
    %65 = tpu.concatenate %61, %62, %63, %64 in 0 : vector<1x8x8xf32>, vector<1x8x8xf32>, vector<1x8x8xf32>, vector<1x8x8xf32> -> vector<4x8x8xf32>
    %66 = vector.extract_strided_slice %38 {offsets = [0, 0], sizes = [8, 8], strides = [1, 1]} : vector<8x32xf32> to vector<8x8xf32>
    %67 = vector.extract_strided_slice %38 {offsets = [0, 8], sizes = [8, 8], strides = [1, 1]} : vector<8x32xf32> to vector<8x8xf32>
    %68 = vector.extract_strided_slice %38 {offsets = [0, 16], sizes = [8, 8], strides = [1, 1]} : vector<8x32xf32> to vector<8x8xf32>
    %69 = vector.extract_strided_slice %38 {offsets = [0, 24], sizes = [8, 8], strides = [1, 1]} : vector<8x32xf32> to vector<8x8xf32>
    %70 = vector.shape_cast %66 : vector<8x8xf32> to vector<1x8x8xf32>
    %71 = vector.shape_cast %67 : vector<8x8xf32> to vector<1x8x8xf32>
    %72 = vector.shape_cast %68 : vector<8x8xf32> to vector<1x8x8xf32>
    %73 = vector.shape_cast %69 : vector<8x8xf32> to vector<1x8x8xf32>
    %74 = tpu.concatenate %70, %71, %72, %73 in 0 : vector<1x8x8xf32>, vector<1x8x8xf32>, vector<1x8x8xf32>, vector<1x8x8xf32> -> vector<4x8x8xf32>
    "tpu.trace_start"() <{level = 10 : i32, message = "hqd,hkd->hqk"}> : () -> ()
    %cst_21 = arith.constant dense<0.000000e+00> : vector<4x8x8xf32>
    %75 = tpu.matmul %56, %65, %cst_21 {dimension_numbers = #tpu.dot_dimension_numbers<[2], [2], [1], [1], [0, 0, 0, 1, 1, 1], [0], [0]>} : vector<4x8x8xf32>, vector<4x8x8xf32>, vector<4x8x8xf32> -> vector<4x8x8xf32>
    "tpu.trace_stop"() : () -> ()
    %c0_22 = arith.constant 0 : index
    %c0_23 = arith.constant 0 : index
    %c0_24 = arith.constant 0 : index
    %76 = vector.load %arg3[%c0_22, %c0_23, %c0_24] : memref<1x1x8xf32, #tpu.memory_space<vmem>>, vector<1x1x8xf32>
    %77 = vector.shape_cast %76 : vector<1x1x8xf32> to vector<1x8xf32>
    %cst_25 = arith.constant 0.000000e+00 : f32
    %78 = vector.broadcast %cst_25 : f32 to vector<1x8xf32>
    %79 = arith.cmpf ogt, %77, %78 : vector<1x8xf32>
    %80 = vector.shape_cast %79 : vector<1x8xi1> to vector<1x1x8xi1>
    %cst_26 = arith.constant -1.000000e+09 : f32
    %81 = vector.shape_cast %80 : vector<1x1x8xi1> to vector<1x1x8xi1>
    %82 = vector.broadcast %81 : vector<1x1x8xi1> to vector<4x8x8xi1>
    %83 = vector.broadcast %cst_26 : f32 to vector<4x8x8xf32>
    %84 = arith.select %82, %75, %83 : vector<4x8x8xi1>, vector<4x8x8xf32>
    %cst_27 = arith.constant dense<0xFF800000> : vector<4x8xf32>
    %85 = vector.multi_reduction <maximumf>, %84, %cst_27 [2] : vector<4x8x8xf32> to vector<4x8xf32>
    %86 = vector.shape_cast %85 : vector<4x8xf32> to vector<4x8x1xf32>
    %87 = vector.broadcast %86 : vector<4x8x1xf32> to vector<4x8x8xf32>
    %88 = arith.subf %84, %87 : vector<4x8x8xf32>
    %89 = math.exp %88 : vector<4x8x8xf32>
    %cst_28 = arith.constant dense<0.000000e+00> : vector<4x8xf32>
    %90 = vector.multi_reduction <add>, %89, %cst_28 [2] : vector<4x8x8xf32> to vector<4x8xf32>
    %91 = vector.shape_cast %90 : vector<4x8xf32> to vector<4x8x1xf32>
    %92 = tpu.reciprocal %91 {approx = true} : vector<4x8x1xf32> -> vector<4x8x1xf32>
    %93 = vector.broadcast %92 : vector<4x8x1xf32> to vector<4x8x8xf32>
    %94 = arith.mulf %89, %93 : vector<4x8x8xf32>
    "tpu.trace_start"() <{level = 10 : i32, message = "hqk,hkd->hqd"}> : () -> ()
    %cst_29 = arith.constant dense<0.000000e+00> : vector<4x8x8xf32>
    %95 = tpu.matmul %94, %74, %cst_29 {dimension_numbers = #tpu.dot_dimension_numbers<[2], [1], [1], [2], [0, 0, 0, 1, 1, 2], [0], [0]>} : vector<4x8x8xf32>, vector<4x8x8xf32>, vector<4x8x8xf32> -> vector<4x8x8xf32>
    "tpu.trace_stop"() : () -> ()
    %96 = vector.extract_strided_slice %95 {offsets = [0, 0, 0], sizes = [1, 8, 8], strides = [1, 1, 1]} : vector<4x8x8xf32> to vector<1x8x8xf32>
    %97 = vector.shape_cast %96 : vector<1x8x8xf32> to vector<8x8xf32>
    %c0_30 = arith.constant 0 : index
    %c0_31 = arith.constant 0 : index
    %98 = vector.load %arg19[%c0_30, %c0_31] : memref<8x32xf32, #tpu.memory_space<vmem>>, vector<8x8xf32>
    tpu.vector_store %arg19[%c0_30, %c0_31], %97 {strides = array<i32>} : memref<8x32xf32, #tpu.memory_space<vmem>>, vector<8x8xf32>,
    %99 = vector.extract_strided_slice %95 {offsets = [1, 0, 0], sizes = [1, 8, 8], strides = [1, 1, 1]} : vector<4x8x8xf32> to vector<1x8x8xf32>
    %100 = vector.shape_cast %99 : vector<1x8x8xf32> to vector<8x8xf32>
    %c0_32 = arith.constant 0 : index
    %c8 = arith.constant 8 : index
    %101 = vector.load %arg19[%c0_32, %c8] : memref<8x32xf32, #tpu.memory_space<vmem>>, vector<8x8xf32>
    tpu.vector_store %arg19[%c0_32, %c8], %100 {strides = array<i32>} : memref<8x32xf32, #tpu.memory_space<vmem>>, vector<8x8xf32>,
    %102 = vector.extract_strided_slice %95 {offsets = [2, 0, 0], sizes = [1, 8, 8], strides = [1, 1, 1]} : vector<4x8x8xf32> to vector<1x8x8xf32>
    %103 = vector.shape_cast %102 : vector<1x8x8xf32> to vector<8x8xf32>
    %c0_33 = arith.constant 0 : index
    %c16 = arith.constant 16 : index
    %104 = vector.load %arg19[%c0_33, %c16] : memref<8x32xf32, #tpu.memory_space<vmem>>, vector<8x8xf32>
    tpu.vector_store %arg19[%c0_33, %c16], %103 {strides = array<i32>} : memref<8x32xf32, #tpu.memory_space<vmem>>, vector<8x8xf32>,
    %105 = vector.extract_strided_slice %95 {offsets = [3, 0, 0], sizes = [1, 8, 8], strides = [1, 1, 1]} : vector<4x8x8xf32> to vector<1x8x8xf32>
    %106 = vector.shape_cast %105 : vector<1x8x8xf32> to vector<8x8xf32>
    %c0_34 = arith.constant 0 : index
    %c24 = arith.constant 24 : index
    %107 = vector.load %arg19[%c0_34, %c24] : memref<8x32xf32, #tpu.memory_space<vmem>>, vector<8x8xf32>
    tpu.vector_store %arg19[%c0_34, %c24], %106 {strides = array<i32>} : memref<8x32xf32, #tpu.memory_space<vmem>>, vector<8x8xf32>,
    %c0_35 = arith.constant 0 : index
    %c0_36 = arith.constant 0 : index
    %108 = vector.load %arg19[%c0_35, %c0_36] : memref<8x32xf32, #tpu.memory_space<vmem>>, vector<8x32xf32>
    %c0_37 = arith.constant 0 : index
    %c0_38 = arith.constant 0 : index
    %109 = vector.load %arg10[%c0_37, %c0_38] : memref<32x32xf32, #tpu.memory_space<vmem>>, vector<32x32xf32>
    %cst_39 = arith.constant dense<0.000000e+00> : vector<8x32xf32>
    %110 = tpu.matmul %108, %109, %cst_39 {dimension_numbers = #tpu.dot_dimension_numbers<[1], [0], [0], [1], [0, 0, 1, 1], [], []>} : vector<8x32xf32>, vector<32x32xf32>, vector<8x32xf32> -> vector<8x32xf32>
    %c0_40 = arith.constant 0 : index
    %c0_41 = arith.constant 0 : index
    %111 = vector.load %arg11[%c0_40, %c0_41] : memref<1x32xf32, #tpu.memory_space<vmem>>, vector<1x32xf32>
    %112 = vector.shape_cast %111 : vector<1x32xf32> to vector<32xf32>
    %113 = vector.shape_cast %112 : vector<32xf32> to vector<1x32xf32>
    %114 = vector.broadcast %113 : vector<1x32xf32> to vector<8x32xf32>
    %115 = arith.addf %110, %114 : vector<8x32xf32>
    %116 = arith.addf %1, %115 : vector<8x32xf32>
    %c0_42 = arith.constant 0 : index
    %c0_43 = arith.constant 0 : index
    %117 = vector.load %arg12[%c0_42, %c0_43] : memref<1x32xf32, #tpu.memory_space<vmem>>, vector<1x32xf32>
    %118 = vector.shape_cast %117 : vector<1x32xf32> to vector<32xf32>
    %c0_44 = arith.constant 0 : index
    %c0_45 = arith.constant 0 : index
    %119 = vector.load %arg13[%c0_44, %c0_45] : memref<1x32xf32, #tpu.memory_space<vmem>>, vector<1x32xf32>
    %120 = vector.shape_cast %119 : vector<1x32xf32> to vector<32xf32>
    %cst_46 = arith.constant dense<0.000000e+00> : vector<8xf32>
    %121 = vector.multi_reduction <add>, %116, %cst_46 [1] : vector<8x32xf32> to vector<8xf32>
    %122 = vector.shape_cast %121 : vector<8xf32> to vector<8x1xf32>
    %cst_47 = arith.constant 3.200000e+01 : f32
    %123 = vector.broadcast %cst_47 : f32 to vector<8x1xf32>
    %124 = arith.divf %122, %123 : vector<8x1xf32>
    %125 = arith.mulf %116, %116 : vector<8x32xf32>
    %cst_48 = arith.constant dense<0.000000e+00> : vector<8xf32>
    %126 = vector.multi_reduction <add>, %125, %cst_48 [1] : vector<8x32xf32> to vector<8xf32>
    %127 = vector.shape_cast %126 : vector<8xf32> to vector<8x1xf32>
    %cst_49 = arith.constant 3.200000e+01 : f32
    %128 = vector.broadcast %cst_49 : f32 to vector<8x1xf32>
    %129 = arith.divf %127, %128 : vector<8x1xf32>
    %130 = arith.mulf %124, %124 : vector<8x1xf32>
    %131 = arith.subf %129, %130 : vector<8x1xf32>
    %132 = vector.broadcast %124 : vector<8x1xf32> to vector<8x32xf32>
    %133 = arith.subf %116, %132 : vector<8x32xf32>
    %cst_50 = arith.constant 9.99999974E-6 : f32
    %134 = vector.broadcast %cst_50 : f32 to vector<8x1xf32>
    %135 = arith.addf %131, %134 : vector<8x1xf32>
    %136 = math.rsqrt %135 : vector<8x1xf32>
    %137 = vector.broadcast %136 : vector<8x1xf32> to vector<8x32xf32>
    %138 = arith.mulf %133, %137 : vector<8x32xf32>
    %139 = vector.shape_cast %118 : vector<32xf32> to vector<1x32xf32>
    %140 = vector.broadcast %139 : vector<1x32xf32> to vector<8x32xf32>
    %141 = arith.mulf %138, %140 : vector<8x32xf32>
    %142 = vector.shape_cast %120 : vector<32xf32> to vector<1x32xf32>
    %143 = vector.broadcast %142 : vector<1x32xf32> to vector<8x32xf32>
    %144 = arith.addf %141, %143 : vector<8x32xf32>
    %c0_51 = arith.constant 0 : index
    %c0_52 = arith.constant 0 : index
    %145 = vector.load %arg14[%c0_51, %c0_52] : memref<32x64xf32, #tpu.memory_space<vmem>>, vector<32x64xf32>
    %cst_53 = arith.constant dense<0.000000e+00> : vector<8x64xf32>
    %146 = tpu.matmul %144, %145, %cst_53 {dimension_numbers = #tpu.dot_dimension_numbers<[1], [0], [0], [1], [0, 0, 1, 1], [], []>} : vector<8x32xf32>, vector<32x64xf32>, vector<8x64xf32> -> vector<8x64xf32>
    %c0_54 = arith.constant 0 : index
    %c0_55 = arith.constant 0 : index
    %147 = vector.load %arg15[%c0_54, %c0_55] : memref<1x64xf32, #tpu.memory_space<vmem>>, vector<1x64xf32>
    %148 = vector.shape_cast %147 : vector<1x64xf32> to vector<64xf32>
    %149 = vector.shape_cast %148 : vector<64xf32> to vector<1x64xf32>
    %150 = vector.broadcast %149 : vector<1x64xf32> to vector<8x64xf32>
    %151 = arith.addf %146, %150 : vector<8x64xf32>
    %cst_56 = arith.constant 0.000000e+00 : f32
    %152 = vector.broadcast %cst_56 : f32 to vector<8x64xf32>
    %153 = arith.maximumf %151, %152 : vector<8x64xf32>
    %c0_57 = arith.constant 0 : index
    %c0_58 = arith.constant 0 : index
    %154 = vector.load %arg16[%c0_57, %c0_58] : memref<64x32xf32, #tpu.memory_space<vmem>>, vector<64x32xf32>
    %cst_59 = arith.constant dense<0.000000e+00> : vector<8x32xf32>
    %155 = tpu.matmul %153, %154, %cst_59 {dimension_numbers = #tpu.dot_dimension_numbers<[1], [0], [0], [1], [0, 0, 1, 1], [], []>} : vector<8x64xf32>, vector<64x32xf32>, vector<8x32xf32> -> vector<8x32xf32>
    %c0_60 = arith.constant 0 : index
    %c0_61 = arith.constant 0 : index
    %156 = vector.load %arg17[%c0_60, %c0_61] : memref<1x32xf32, #tpu.memory_space<vmem>>, vector<1x32xf32>
    %157 = vector.shape_cast %156 : vector<1x32xf32> to vector<32xf32>
    %158 = vector.shape_cast %157 : vector<32xf32> to vector<1x32xf32>
    %159 = vector.broadcast %158 : vector<1x32xf32> to vector<8x32xf32>
    %160 = arith.addf %155, %159 : vector<8x32xf32>
    %161 = arith.addf %116, %160 : vector<8x32xf32>
    %c0_62 = arith.constant 0 : index
    %c0_63 = arith.constant 0 : index
    %c0_64 = arith.constant 0 : index
    %162 = vector.load %arg18[%c0_62, %c0_63, %c0_64] : memref<1x8x32xf32, #tpu.memory_space<vmem>>, vector<1x8x32xf32>
    %163 = vector.shape_cast %162 : vector<1x8x32xf32> to vector<8x32xf32>
    %164 = vector.shape_cast %161 : vector<8x32xf32> to vector<1x8x32xf32>
    tpu.vector_store %arg18[%c0_62, %c0_63, %c0_64], %164 {strides = array<i32>} : memref<1x8x32xf32, #tpu.memory_space<vmem>>, vector<1x8x32xf32>,
    return
  }
  func.func @transform_0(%arg0: i32, %arg1: i32) -> (i32, i32, i32) {
    %c0_i32 = arith.constant 0 : i32
    %c0_i32_0 = arith.constant 0 : i32
    %c0_i32_1 = arith.constant 0 : i32
    return %arg0, %c0_i32, %c0_i32_0 : i32, i32, i32
  }
  func.func @transform_1(%arg0: i32, %arg1: i32) -> (i32, i32, i32) {
    %c0_i32 = arith.constant 0 : i32
    %c0_i32_0 = arith.constant 0 : i32
    %c0_i32_1 = arith.constant 0 : i32
    return %arg0, %c0_i32, %c0_i32_0 : i32, i32, i32
  }
  func.func @transform_2(%arg0: i32, %arg1: i32) -> (i32, i32) {
    %c0_i32 = arith.constant 0 : i32
    %c0_i32_0 = arith.constant 0 : i32
    %c0_i32_1 = arith.constant 0 : i32
    return %c0_i32, %c0_i32_0 : i32, i32
  }
  func.func @transform_3(%arg0: i32, %arg1: i32) -> (i32, i32) {
    %c0_i32 = arith.constant 0 : i32
    %c0_i32_0 = arith.constant 0 : i32
    %c0_i32_1 = arith.constant 0 : i32
    return %c0_i32, %c0_i32_0 : i32, i32
  }
  func.func @transform_4(%arg0: i32, %arg1: i32) -> (i32, i32) {
    %c0_i32 = arith.constant 0 : i32
    %c0_i32_0 = arith.constant 0 : i32
    %c0_i32_1 = arith.constant 0 : i32
    return %c0_i32, %c0_i32_0 : i32, i32
  }
  func.func @transform_5(%arg0: i32, %arg1: i32) -> (i32, i32) {
    %c0_i32 = arith.constant 0 : i32
    %c0_i32_0 = arith.constant 0 : i32
    %c0_i32_1 = arith.constant 0 : i32
    return %c0_i32, %c0_i32_0 : i32, i32
  }
  func.func @transform_6(%arg0: i32, %arg1: i32) -> (i32, i32) {
    %c0_i32 = arith.constant 0 : i32
    %c0_i32_0 = arith.constant 0 : i32
    %c0_i32_1 = arith.constant 0 : i32
    return %c0_i32, %c0_i32_0 : i32, i32
  }
  func.func @transform_7(%arg0: i32, %arg1: i32) -> (i32, i32) {
    %c0_i32 = arith.constant 0 : i32
    %c0_i32_0 = arith.constant 0 : i32
    %c0_i32_1 = arith.constant 0 : i32
    return %c0_i32, %c0_i32_0 : i32, i32
  }
  func.func @transform_8(%arg0: i32, %arg1: i32) -> (i32, i32) {
    %c0_i32 = arith.constant 0 : i32
    %c0_i32_0 = arith.constant 0 : i32
    %c0_i32_1 = arith.constant 0 : i32
    return %c0_i32, %c0_i32_0 : i32, i32
  }
  func.func @transform_9(%arg0: i32, %arg1: i32) -> (i32, i32) {
    %c0_i32 = arith.constant 0 : i32
    %c0_i32_0 = arith.constant 0 : i32
    %c0_i32_1 = arith.constant 0 : i32
    return %c0_i32, %c0_i32_0 : i32, i32
  }
  func.func @transform_10(%arg0: i32, %arg1: i32) -> (i32, i32) {
    %c0_i32 = arith.constant 0 : i32
    %c0_i32_0 = arith.constant 0 : i32
    %c0_i32_1 = arith.constant 0 : i32
    return %c0_i32, %c0_i32_0 : i32, i32
  }
  func.func @transform_11(%arg0: i32, %arg1: i32) -> (i32, i32) {
    %c0_i32 = arith.constant 0 : i32
    %c0_i32_0 = arith.constant 0 : i32
    %c0_i32_1 = arith.constant 0 : i32
    return %c0_i32, %c0_i32_0 : i32, i32
  }
  func.func @transform_12(%arg0: i32, %arg1: i32) -> (i32, i32) {
    %c0_i32 = arith.constant 0 : i32
    %c0_i32_0 = arith.constant 0 : i32
    %c0_i32_1 = arith.constant 0 : i32
    return %c0_i32, %c0_i32_0 : i32, i32
  }
  func.func @transform_13(%arg0: i32, %arg1: i32) -> (i32, i32) {
    %c0_i32 = arith.constant 0 : i32
    %c0_i32_0 = arith.constant 0 : i32
    %c0_i32_1 = arith.constant 0 : i32
    return %c0_i32, %c0_i32_0 : i32, i32
  }
  func.func @transform_14(%arg0: i32, %arg1: i32) -> (i32, i32) {
    %c0_i32 = arith.constant 0 : i32
    %c0_i32_0 = arith.constant 0 : i32
    %c0_i32_1 = arith.constant 0 : i32
    return %c0_i32, %c0_i32_0 : i32, i32
  }
  func.func @transform_15(%arg0: i32, %arg1: i32) -> (i32, i32) {
    %c0_i32 = arith.constant 0 : i32
    %c0_i32_0 = arith.constant 0 : i32
    %c0_i32_1 = arith.constant 0 : i32
    return %c0_i32, %c0_i32_0 : i32, i32
  }
  func.func @transform_16(%arg0: i32, %arg1: i32) -> (i32, i32, i32) {
    %c0_i32 = arith.constant 0 : i32
    %c0_i32_0 = arith.constant 0 : i32
    return %arg0, %arg1, %c0_i32 : i32, i32, i32
  }
}

</mosaic_0001>

<llo_original>
// kernel: tpu_custom_call.1
$region0: #{tpu_custom_call.1}
  #allocation0 [shape = 'u32[]', space=smem, size = 0x4, offset = 0x4, fixed_abs, tag = 'smem constant byte address 0x4 - core index']
  #allocation1 [shape = 'u32[72,128]{1,0:T(1,128)}', space=vmem, size = 0x9000, scoped, tag = 'internal scratch']
  #allocation2 [shape = 'f32[8,32]{1,0:T(8,128)}', space=vmem, size = 0x1000, scoped, tag = 'scratch operand']
  %s0 = inlined_call_operand.hbm [shape: f32[2,8,32], index: 0, kind: input, shape index: {}]
  %s1 = inlined_call_operand.hbm [shape: f32[2,1,8], index: 1, kind: input, shape index: {}]
  %s2 = inlined_call_operand.vmem [shape: f32[1,32], index: 2, kind: input, shape index: {}]
  %s3 = inlined_call_operand.hbm [shape: f32[1,32], index: 3, kind: input, shape index: {}]
  %s4 = inlined_call_operand.vmem [shape: f32[32,32], index: 4, kind: input, shape index: {}]
  %s5 = inlined_call_operand.vmem [shape: f32[1,32], index: 5, kind: input, shape index: {}]
  %s6 = inlined_call_operand.vmem [shape: f32[32,64], index: 6, kind: input, shape index: {}]
  %s7 = inlined_call_operand.vmem [shape: f32[1,64], index: 7, kind: input, shape index: {}]
  %s8 = inlined_call_operand.vmem [shape: f32[32,32], index: 8, kind: input, shape index: {}]
  %s9 = inlined_call_operand.vmem [shape: f32[1,32], index: 9, kind: input, shape index: {}]
  %s10 = inlined_call_operand.vmem [shape: f32[1,32], index: 10, kind: input, shape index: {}]
  %s11 = inlined_call_operand.vmem [shape: f32[1,32], index: 11, kind: input, shape index: {}]
  %s12 = inlined_call_operand.hbm [shape: f32[32,64], index: 12, kind: input, shape index: {}]
  %s13 = inlined_call_operand.vmem [shape: f32[1,64], index: 13, kind: input, shape index: {}]
  %s14 = inlined_call_operand.vmem [shape: f32[64,32], index: 14, kind: input, shape index: {}]
  %s15 = inlined_call_operand.vmem [shape: f32[1,32], index: 15, kind: input, shape index: {}]
  %s16 = inlined_call_operand.hbm [shape: f32[2,8,32], index: 16, kind: output, shape index: {}]
  %s17 = sld [smem:[#allocation0]]
  $region113: #{tpu_custom_call.1} parent=0
    _
  %s19 = ssub.s32 1, %s17
  %s20 = scalar_select 0, %s19, %s17
  $region1: #{tpu_custom_call.1} parent=0
    #allocation3 [shape = 'u8[8192]{0}', space=vmem, size = 0x2000, scoped, tag = 'input window, operand 0']
    #allocation4 [shape = 's32[2]{0}', space=sflag, size = 0x8, scoped, tag = 'scoped memory for tpu_custom_call.1']
    #allocation5 [shape = 's32[2]{0}', space=sflag, size = 0x8, scoped, tag = 'scoped memory for tpu_custom_call.1']
    #allocation6 [shape = 'u8[1024]{0}', space=vmem, size = 0x400, scoped, tag = 'input window, operand 1']
    #allocation7 [shape = 's32[2]{0}', space=sflag, size = 0x8, scoped, tag = 'scoped memory for tpu_custom_call.1']
    #allocation8 [shape = 'u8[512]{0}', space=vmem, size = 0x400, scoped, tag = 'input window, operand 3, single buffered']
    #allocation9 [shape = 'u8[16384]{0}', space=vmem, size = 0x4000, scoped, tag = 'input window, operand 12, single buffered']
    #allocation10 [shape = 's32[1]{0}', space=sflag, size = 0x4, scoped, tag = 'scoped memory for tpu_custom_call.1']
    #allocation11 [shape = 'u8[8192]{0}', space=vmem, size = 0x2000, scoped, tag = 'output window, operand 0']
    %21 = vsyncpa [#allocation4], 0
    %s22 = scalar_lea.sflag [#allocation4], 1
    %23 = vsyncpa %s22, 0
    %24 = vsyncpa [#allocation7], 0
    %s25 = scalar_lea.sflag [#allocation7], 1
    %26 = vsyncpa %s25, 0
    %27 = vsyncpa [#allocation10], 0
    %28 = vsyncpa [#allocation5], 0
    %s29 = scalar_lea.sflag [#allocation5], 1
    %30 = vsyncpa %s29, 0
    loop: start=0, step=1, limit=4
    $region2: #{tpu_custom_call.1} parent=1 // loop_pre_header
      _
    $region3: #{tpu_custom_call.1} parent=1 // loop_header
      %s32 = sphi 0, %s36
      %p33 = scmp.ge.s32.totalorder %s32, 4
      %s39 = sphi 0, %s51
      %s40 = sphi 0, %s47
      %s41 = sphi 0, %s39
      %s42 = sphi 0, %s40
      %s43 = sphi 0, %s41
      %s44 = sphi 0, %s42
      %s54 = sphi 0, %s56
      %s57 = sphi 0, %s54
      %s58 = sphi 0, %s57
      %s74 = sphi 0, %s58
      %s80 = sphi 0, %s82
      %s83 = sphi 0, %s80
      %s84 = sphi 0, %s83
      %s100 = sphi 0, %s84
      %s104 = sphi 0, %s104
      %s106 = sphi 0, %s104
      %s107 = sphi 0, %s106
      %s121 = sphi 0, %s107
      %s125 = sphi 0, %s125
      %s127 = sphi 0, %s125
      %s128 = sphi 0, %s127
      %s142 = sphi 0, %s128
      %s146 = sphi 0, %s146
      %s148 = sphi 0, %s146
      %s149 = sphi 0, %s148
      %s163 = sphi 0, %s149
      %s167 = sphi 0, %s167
      %s169 = sphi 0, %s167
      %s170 = sphi 0, %s169
      %s184 = sphi 0, %s170
      %s188 = sphi 0, %s188
      %s190 = sphi 0, %s188
      %s191 = sphi 0, %s190
      %s205 = sphi 0, %s191
      %s209 = sphi 0, %s209
      %s211 = sphi 0, %s209
      %s212 = sphi 0, %s211
      %s226 = sphi 0, %s212
      %s230 = sphi 0, %s230
      %s232 = sphi 0, %s230
      %s233 = sphi 0, %s232
      %s247 = sphi 0, %s233
      %s251 = sphi 0, %s251
      %s253 = sphi 0, %s251
      %s254 = sphi 0, %s253
      %s268 = sphi 0, %s254
      %s272 = sphi 0, %s272
      %s274 = sphi 0, %s272
      %s275 = sphi 0, %s274
      %s289 = sphi 0, %s275
      %s293 = sphi 0, %s293
      %s295 = sphi 0, %s293
      %s296 = sphi 0, %s295
      %s310 = sphi 0, %s296
      %s314 = sphi 0, %s314
      %s316 = sphi 0, %s314
      %s317 = sphi 0, %s316
      %s331 = sphi 0, %s317
      %s335 = sphi 0, %s335
      %s337 = sphi 0, %s335
      %s338 = sphi 0, %s337
      %s352 = sphi 0, %s338
      %s356 = sphi 0, %s356
      %s358 = sphi 0, %s356
      %s359 = sphi 0, %s358
      %s373 = sphi 0, %s359
      %s377 = sphi 0, %s377
      %s379 = sphi 0, %s377
      %s380 = sphi 0, %s379
      %s394 = sphi 0, %s380
      %s402 = sphi 0, %s404
      %s405 = sphi 0, %s402
      %s406 = sphi 0, %s405
      %s422 = sphi 0, %s406
    $region4: #{tpu_custom_call.1} parent=1 // loop_header_branch
      %35 = sbr.rel (%p33) target = $region8
    $region5: #{tpu_custom_call.1} parent=1 // loop_body
      %s37 = ssub.s32 %s32, 1
      %s38 = ssub.s32 %s32, 2
      %s45 = sadd.s32 1, %s40
      %p46 = scmp.ge.s32.totalorder %s45, 1
      %s47 = scalar_select %p46, 0, %s45
      %s48 = sadd.s32 1, %s39
      %s49 = scalar_select %p46, %s48, %s39
      %p50 = scmp.ge.s32.totalorder %s49, 2
      %s51 = scalar_select %p50, 0, %s49
      %s52 = ssub.s32 %s39, %s51
      %p53 = scmp.eq.s32.totalorder %s52, 0
      %s55 = sadd.s32 %s54, 1
      %s56 = scalar_select %p53, %s54, %s55
      %p59 = pneg %p53
      %p60 = scmp.eq.s32.totalorder %s32, 1
      %p61 = por %p59, %p60
      %p62 = scmp.ne.s32.totalorder %s54, %s57
      %p63 = scmp.eq.s32.totalorder %s32, 0
      %p64 = por %p62, %p63
      %p65 = scmp.ne.s32.totalorder %s54, %s57
      %p66 = scmp.eq.s32.totalorder %s37, 1
      %p67 = por %p65, %p66
      %p68 = scmp.ne.s32.totalorder %s57, %s58
      %p69 = scmp.eq.s32.totalorder %s37, 0
      %p70 = por %p68, %p69
      %p71 = scmp.ne.s32.totalorder %s57, %s58
      %p72 = scmp.eq.s32.totalorder %s38, 1
      %p73 = por %p71, %p72
      %p75 = scmp.ne.s32.totalorder %s58, %s74
      %p76 = scmp.eq.s32.totalorder %s38, 0
      %p77 = por %p75, %p76
      %s78 = ssub.s32 %s39, %s51
      %p79 = scmp.eq.s32.totalorder %s78, 0
      %s81 = sadd.s32 %s80, 1
      %s82 = scalar_select %p79, %s80, %s81
      %p85 = pneg %p79
      %p86 = scmp.eq.s32.totalorder %s32, 1
      %p87 = por %p85, %p86
      %p88 = scmp.ne.s32.totalorder %s80, %s83
      %p89 = scmp.eq.s32.totalorder %s32, 0
      %p90 = por %p88, %p89
      %p91 = scmp.ne.s32.totalorder %s80, %s83
      %p92 = scmp.eq.s32.totalorder %s37, 1
      %p93 = por %p91, %p92
      %p94 = scmp.ne.s32.totalorder %s83, %s84
      %p95 = scmp.eq.s32.totalorder %s37, 0
      %p96 = por %p94, %p95
      %p97 = scmp.ne.s32.totalorder %s83, %s84
      %p98 = scmp.eq.s32.totalorder %s38, 1
      %p99 = por %p97, %p98
      %p101 = scmp.ne.s32.totalorder %s84, %s100
      %p102 = scmp.eq.s32.totalorder %s38, 0
      %p103 = por %p101, %p102
      %s105 = sadd.s32 %s104, 1
      %p108 = scmp.eq.s32.totalorder %s32, 1
      %p109 = scmp.ne.s32.totalorder %s104, %s106
      %p110 = scmp.eq.s32.totalorder %s32, 0
      %p111 = por %p109, %p110
      %p112 = scmp.ne.s32.totalorder %s104, %s106
      %p113 = scmp.eq.s32.totalorder %s37, 1
      %p114 = por %p112, %p113
      %p115 = scmp.ne.s32.totalorder %s106, %s107
      %p116 = scmp.eq.s32.totalorder %s37, 0
      %p117 = por %p115, %p116
      %p118 = scmp.ne.s32.totalorder %s106, %s107
      %p119 = scmp.eq.s32.totalorder %s38, 1
      %p120 = por %p118, %p119
      %p122 = scmp.ne.s32.totalorder %s107, %s121
      %p123 = scmp.eq.s32.totalorder %s38, 0
      %p124 = por %p122, %p123
      %s126 = sadd.s32 %s125, 1
      %p129 = scmp.eq.s32.totalorder %s32, 1
      %p130 = scmp.ne.s32.totalorder %s125, %s127
      %p131 = scmp.eq.s32.totalorder %s32, 0
      %p132 = por %p130, %p131
      %p133 = scmp.ne.s32.totalorder %s125, %s127
      %p134 = scmp.eq.s32.totalorder %s37, 1
      %p135 = por %p133, %p134
      %p136 = scmp.ne.s32.totalorder %s127, %s128
      %p137 = scmp.eq.s32.totalorder %s37, 0
      %p138 = por %p136, %p137
      %p139 = scmp.ne.s32.totalorder %s127, %s128
      %p140 = scmp.eq.s32.totalorder %s38, 1
      %p141 = por %p139, %p140
      %p143 = scmp.ne.s32.totalorder %s128, %s142
      %p144 = scmp.eq.s32.totalorder %s38, 0
      %p145 = por %p143, %p144
      %s147 = sadd.s32 %s146, 1
      %p150 = scmp.eq.s32.totalorder %s32, 1
      %p151 = scmp.ne.s32.totalorder %s146, %s148
      %p152 = scmp.eq.s32.totalorder %s32, 0
      %p153 = por %p151, %p152
      %p154 = scmp.ne.s32.totalorder %s146, %s148
      %p155 = scmp.eq.s32.totalorder %s37, 1
      %p156 = por %p154, %p155
      %p157 = scmp.ne.s32.totalorder %s148, %s149
      %p158 = scmp.eq.s32.totalorder %s37, 0
      %p159 = por %p157, %p158
      %p160 = scmp.ne.s32.totalorder %s148, %s149
      %p161 = scmp.eq.s32.totalorder %s38, 1
      %p162 = por %p160, %p161
      %p164 = scmp.ne.s32.totalorder %s149, %s163
      %p165 = scmp.eq.s32.totalorder %s38, 0
      %p166 = por %p164, %p165
      %s168 = sadd.s32 %s167, 1
      %p171 = scmp.eq.s32.totalorder %s32, 1
      %p172 = scmp.ne.s32.totalorder %s167, %s169
      %p173 = scmp.eq.s32.totalorder %s32, 0
      %p174 = por %p172, %p173
      %p175 = scmp.ne.s32.totalorder %s167, %s169
      %p176 = scmp.eq.s32.totalorder %s37, 1
      %p177 = por %p175, %p176
      %p178 = scmp.ne.s32.totalorder %s169, %s170
      %p179 = scmp.eq.s32.totalorder %s37, 0
      %p180 = por %p178, %p179
      %p181 = scmp.ne.s32.totalorder %s169, %s170
      %p182 = scmp.eq.s32.totalorder %s38, 1
      %p183 = por %p181, %p182
      %p185 = scmp.ne.s32.totalorder %s170, %s184
      %p186 = scmp.eq.s32.totalorder %s38, 0
      %p187 = por %p185, %p186
      %s189 = sadd.s32 %s188, 1
      %p192 = scmp.eq.s32.totalorder %s32, 1
      %p193 = scmp.ne.s32.totalorder %s188, %s190
      %p194 = scmp.eq.s32.totalorder %s32, 0
      %p195 = por %p193, %p194
      %p196 = scmp.ne.s32.totalorder %s188, %s190
      %p197 = scmp.eq.s32.totalorder %s37, 1
      %p198 = por %p196, %p197
      %p199 = scmp.ne.s32.totalorder %s190, %s191
      %p200 = scmp.eq.s32.totalorder %s37, 0
      %p201 = por %p199, %p200
      %p202 = scmp.ne.s32.totalorder %s190, %s191
      %p203 = scmp.eq.s32.totalorder %s38, 1
      %p204 = por %p202, %p203
      %p206 = scmp.ne.s32.totalorder %s191, %s205
      %p207 = scmp.eq.s32.totalorder %s38, 0
      %p208 = por %p206, %p207
      %s210 = sadd.s32 %s209, 1
      %p213 = scmp.eq.s32.totalorder %s32, 1
      %p214 = scmp.ne.s32.totalorder %s209, %s211
      %p215 = scmp.eq.s32.totalorder %s32, 0
      %p216 = por %p214, %p215
      %p217 = scmp.ne.s32.totalorder %s209, %s211
      %p218 = scmp.eq.s32.totalorder %s37, 1
      %p219 = por %p217, %p218
      %p220 = scmp.ne.s32.totalorder %s211, %s212
      %p221 = scmp.eq.s32.totalorder %s37, 0
      %p222 = por %p220, %p221
      %p223 = scmp.ne.s32.totalorder %s211, %s212
      %p224 = scmp.eq.s32.totalorder %s38, 1
      %p225 = por %p223, %p224
      %p227 = scmp.ne.s32.totalorder %s212, %s226
      %p228 = scmp.eq.s32.totalorder %s38, 0
      %p229 = por %p227, %p228
      %s231 = sadd.s32 %s230, 1
      %p234 = scmp.eq.s32.totalorder %s32, 1
      %p235 = scmp.ne.s32.totalorder %s230, %s232
      %p236 = scmp.eq.s32.totalorder %s32, 0
      %p237 = por %p235, %p236
      %p238 = scmp.ne.s32.totalorder %s230, %s232
      %p239 = scmp.eq.s32.totalorder %s37, 1
      %p240 = por %p238, %p239
      %p241 = scmp.ne.s32.totalorder %s232, %s233
      %p242 = scmp.eq.s32.totalorder %s37, 0
      %p243 = por %p241, %p242
      %p244 = scmp.ne.s32.totalorder %s232, %s233
      %p245 = scmp.eq.s32.totalorder %s38, 1
      %p246 = por %p244, %p245
      %p248 = scmp.ne.s32.totalorder %s233, %s247
      %p249 = scmp.eq.s32.totalorder %s38, 0
      %p250 = por %p248, %p249
      %s252 = sadd.s32 %s251, 1
      %p255 = scmp.eq.s32.totalorder %s32, 1
      %p256 = scmp.ne.s32.totalorder %s251, %s253
      %p257 = scmp.eq.s32.totalorder %s32, 0
      %p258 = por %p256, %p257
      %p259 = scmp.ne.s32.totalorder %s251, %s253
      %p260 = scmp.eq.s32.totalorder %s37, 1
      %p261 = por %p259, %p260
      %p262 = scmp.ne.s32.totalorder %s253, %s254
      %p263 = scmp.eq.s32.totalorder %s37, 0
      %p264 = por %p262, %p263
      %p265 = scmp.ne.s32.totalorder %s253, %s254
      %p266 = scmp.eq.s32.totalorder %s38, 1
      %p267 = por %p265, %p266
      %p269 = scmp.ne.s32.totalorder %s254, %s268
      %p270 = scmp.eq.s32.totalorder %s38, 0
      %p271 = por %p269, %p270
      %s273 = sadd.s32 %s272, 1
      %p276 = scmp.eq.s32.totalorder %s32, 1
      %p277 = scmp.ne.s32.totalorder %s272, %s274
      %p278 = scmp.eq.s32.totalorder %s32, 0
      %p279 = por %p277, %p278
      %p280 = scmp.ne.s32.totalorder %s272, %s274
      %p281 = scmp.eq.s32.totalorder %s37, 1
      %p282 = por %p280, %p281
      %p283 = scmp.ne.s32.totalorder %s274, %s275
      %p284 = scmp.eq.s32.totalorder %s37, 0
      %p285 = por %p283, %p284
      %p286 = scmp.ne.s32.totalorder %s274, %s275
      %p287 = scmp.eq.s32.totalorder %s38, 1
      %p288 = por %p286, %p287
      %p290 = scmp.ne.s32.totalorder %s275, %s289
      %p291 = scmp.eq.s32.totalorder %s38, 0
      %p292 = por %p290, %p291
      %s294 = sadd.s32 %s293, 1
      %p297 = scmp.eq.s32.totalorder %s32, 1
      %p298 = scmp.ne.s32.totalorder %s293, %s295
      %p299 = scmp.eq.s32.totalorder %s32, 0
      %p300 = por %p298, %p299
      %p301 = scmp.ne.s32.totalorder %s293, %s295
      %p302 = scmp.eq.s32.totalorder %s37, 1
      %p303 = por %p301, %p302
      %p304 = scmp.ne.s32.totalorder %s295, %s296
      %p305 = scmp.eq.s32.totalorder %s37, 0
      %p306 = por %p304, %p305
      %p307 = scmp.ne.s32.totalorder %s295, %s296
      %p308 = scmp.eq.s32.totalorder %s38, 1
      %p309 = por %p307, %p308
      %p311 = scmp.ne.s32.totalorder %s296, %s310
      %p312 = scmp.eq.s32.totalorder %s38, 0
      %p313 = por %p311, %p312
      %s315 = sadd.s32 %s314, 1
      %p318 = scmp.eq.s32.totalorder %s32, 1
      %p319 = scmp.ne.s32.totalorder %s314, %s316
      %p320 = scmp.eq.s32.totalorder %s32, 0
      %p321 = por %p319, %p320
      %p322 = scmp.ne.s32.totalorder %s314, %s316
      %p323 = scmp.eq.s32.totalorder %s37, 1
      %p324 = por %p322, %p323
      %p325 = scmp.ne.s32.totalorder %s316, %s317
      %p326 = scmp.eq.s32.totalorder %s37, 0
      %p327 = por %p325, %p326
      %p328 = scmp.ne.s32.totalorder %s316, %s317
      %p329 = scmp.eq.s32.totalorder %s38, 1
      %p330 = por %p328, %p329
      %p332 = scmp.ne.s32.totalorder %s317, %s331
      %p333 = scmp.eq.s32.totalorder %s38, 0
      %p334 = por %p332, %p333
      %s336 = sadd.s32 %s335, 1
      %p339 = scmp.eq.s32.totalorder %s32, 1
      %p340 = scmp.ne.s32.totalorder %s335, %s337
      %p341 = scmp.eq.s32.totalorder %s32, 0
      %p342 = por %p340, %p341
      %p343 = scmp.ne.s32.totalorder %s335, %s337
      %p344 = scmp.eq.s32.totalorder %s37, 1
      %p345 = por %p343, %p344
      %p346 = scmp.ne.s32.totalorder %s337, %s338
      %p347 = scmp.eq.s32.totalorder %s37, 0
      %p348 = por %p346, %p347
      %p349 = scmp.ne.s32.totalorder %s337, %s338
      %p350 = scmp.eq.s32.totalorder %s38, 1
      %p351 = por %p349, %p350
      %p353 = scmp.ne.s32.totalorder %s338, %s352
      %p354 = scmp.eq.s32.totalorder %s38, 0
      %p355 = por %p353, %p354
      %s357 = sadd.s32 %s356, 1
      %p360 = scmp.eq.s32.totalorder %s32, 1
      %p361 = scmp.ne.s32.totalorder %s356, %s358
      %p362 = scmp.eq.s32.totalorder %s32, 0
      %p363 = por %p361, %p362
      %p364 = scmp.ne.s32.totalorder %s356, %s358
      %p365 = scmp.eq.s32.totalorder %s37, 1
      %p366 = por %p364, %p365
      %p367 = scmp.ne.s32.totalorder %s358, %s359
      %p368 = scmp.eq.s32.totalorder %s37, 0
      %p369 = por %p367, %p368
      %p370 = scmp.ne.s32.totalorder %s358, %s359
      %p371 = scmp.eq.s32.totalorder %s38, 1
      %p372 = por %p370, %p371
      %p374 = scmp.ne.s32.totalorder %s359, %s373
      %p375 = scmp.eq.s32.totalorder %s38, 0
      %p376 = por %p374, %p375
      %s378 = sadd.s32 %s377, 1
      %p381 = scmp.eq.s32.totalorder %s32, 1
      %p382 = scmp.ne.s32.totalorder %s377, %s379
      %p383 = scmp.eq.s32.totalorder %s32, 0
      %p384 = por %p382, %p383
      %p385 = scmp.ne.s32.totalorder %s377, %s379
      %p386 = scmp.eq.s32.totalorder %s37, 1
      %p387 = por %p385, %p386
      %p388 = scmp.ne.s32.totalorder %s379, %s380
      %p389 = scmp.eq.s32.totalorder %s37, 0
      %p390 = por %p388, %p389
      %p391 = scmp.ne.s32.totalorder %s379, %s380
      %p392 = scmp.eq.s32.totalorder %s38, 1
      %p393 = por %p391, %p392
      %p395 = scmp.ne.s32.totalorder %s380, %s394
      %p396 = scmp.eq.s32.totalorder %s38, 0
      %p397 = por %p395, %p396
      %s398 = ssub.s32 %s39, %s51
      %s399 = ssub.s32 %s40, %s47
      %s400 = sor.u32 %s398, %s399
      %p401 = scmp.eq.s32.totalorder %s400, 0
      %s403 = sadd.s32 %s402, 1
      %s404 = scalar_select %p401, %s402, %s403
      %p407 = pneg %p401
      %p408 = scmp.eq.s32.totalorder %s32, 1
      %p409 = por %p407, %p408
      %p410 = scmp.ne.s32.totalorder %s402, %s405
      %p411 = scmp.eq.s32.totalorder %s32, 0
      %p412 = por %p410, %p411
      %p413 = scmp.ne.s32.totalorder %s402, %s405
      %p414 = scmp.eq.s32.totalorder %s37, 1
      %p415 = por %p413, %p414
      %p416 = scmp.ne.s32.totalorder %s405, %s406
      %p417 = scmp.eq.s32.totalorder %s37, 0
      %p418 = por %p416, %p417
      %p419 = scmp.ne.s32.totalorder %s405, %s406
      %p420 = scmp.eq.s32.totalorder %s38, 1
      %p421 = por %p419, %p420
      %p423 = scmp.ne.s32.totalorder %s406, %s422
      %p424 = scmp.eq.s32.totalorder %s38, 0
      %p425 = por %p423, %p424
      %p426 = scmp.le.s32.totalorder 1, %s32
      %p427 = scmp.lt.s32.totalorder %s32, 3
      %p428 = pnand %p426, %p427
      %p429 = pneg %p428
      // Predicated region
      $region9: #{tpu_custom_call.1} parent=5 // pred_check
        _
      $region10: #{tpu_custom_call.1} parent=5 // pred_check_branch
        %431 = sbr.rel (%p428) target = $region12
      $region11: #{tpu_custom_call.1} parent=5 // pred_region
        %s432 = ssub.s32 %s32, 1
        // Predicated region
        $region13: #{tpu_custom_call.1} parent=11 // pred_check
          %p433 = pneg %p117
        $region14: #{tpu_custom_call.1} parent=11 // pred_check_branch
          %435 = sbr.rel (%p433) target = $region16
        $region15: #{tpu_custom_call.1} parent=11 // pred_region
          _
        $region16: #{tpu_custom_call.1} parent=11 // pred_fallthru
          _
        // Predicated region
        $region17: #{tpu_custom_call.1} parent=11 // pred_check
          %p436 = pneg %p138
        $region18: #{tpu_custom_call.1} parent=11 // pred_check_branch
          %438 = sbr.rel (%p436) target = $region20
        $region19: #{tpu_custom_call.1} parent=11 // pred_region
          %440 = vsyncadd [#allocation7], 0
          %s442 = sshll.u32 %s3, 4
          %s443 = int_to_ptr.hbm [resolvable:$true] %s442
          %s444 = sshll.u32 [#allocation8], 4
          %s445 = int_to_ptr.vmem [resolvable:$true] %s444
          %447 = dma.hbm_to_vmem [thread:$0]  %s443, 16, %s445, [#allocation7]
        $region20: #{tpu_custom_call.1} parent=11 // pred_fallthru
          _
        // Predicated region
        $region21: #{tpu_custom_call.1} parent=11 // pred_check
          %p448 = pneg %p159
        $region22: #{tpu_custom_call.1} parent=11 // pred_check_branch
          %450 = sbr.rel (%p448) target = $region24
        $region23: #{tpu_custom_call.1} parent=11 // pred_region
          _
        $region24: #{tpu_custom_call.1} parent=11 // pred_fallthru
          _
        // Predicated region
        $region25: #{tpu_custom_call.1} parent=11 // pred_check
          %p451 = pneg %p180
        $region26: #{tpu_custom_call.1} parent=11 // pred_check_branch
          %453 = sbr.rel (%p451) target = $region28
        $region27: #{tpu_custom_call.1} parent=11 // pred_region
          _
        $region28: #{tpu_custom_call.1} parent=11 // pred_fallthru
          _
        // Predicated region
        $region29: #{tpu_custom_call.1} parent=11 // pred_check
          %p454 = pneg %p201
        $region30: #{tpu_custom_call.1} parent=11 // pred_check_branch
          %456 = sbr.rel (%p454) target = $region32
        $region31: #{tpu_custom_call.1} parent=11 // pred_region
          _
        $region32: #{tpu_custom_call.1} parent=11 // pred_fallthru
          _
        // Predicated region
        $region33: #{tpu_custom_call.1} parent=11 // pred_check
          %p457 = pneg %p222
        $region34: #{tpu_custom_call.1} parent=11 // pred_check_branch
          %459 = sbr.rel (%p457) target = $region36
        $region35: #{tpu_custom_call.1} parent=11 // pred_region
          _
        $region36: #{tpu_custom_call.1} parent=11 // pred_fallthru
          _
        // Predicated region
        $region37: #{tpu_custom_call.1} parent=11 // pred_check
          %p460 = pneg %p243
        $region38: #{tpu_custom_call.1} parent=11 // pred_check_branch
          %462 = sbr.rel (%p460) target = $region40
        $region39: #{tpu_custom_call.1} parent=11 // pred_region
          _
        $region40: #{tpu_custom_call.1} parent=11 // pred_fallthru
          _
        // Predicated region
        $region41: #{tpu_custom_call.1} parent=11 // pred_check
          %p463 = pneg %p264
        $region42: #{tpu_custom_call.1} parent=11 // pred_check_branch
          %465 = sbr.rel (%p463) target = $region44
        $region43: #{tpu_custom_call.1} parent=11 // pred_region
          _
        $region44: #{tpu_custom_call.1} parent=11 // pred_fallthru
          _
        // Predicated region
        $region45: #{tpu_custom_call.1} parent=11 // pred_check
          %p466 = pneg %p285
        $region46: #{tpu_custom_call.1} parent=11 // pred_check_branch
          %468 = sbr.rel (%p466) target = $region48
        $region47: #{tpu_custom_call.1} parent=11 // pred_region
          _
        $region48: #{tpu_custom_call.1} parent=11 // pred_fallthru
          _
        // Predicated region
        $region49: #{tpu_custom_call.1} parent=11 // pred_check
          %p469 = pneg %p306
        $region50: #{tpu_custom_call.1} parent=11 // pred_check_branch
          %471 = sbr.rel (%p469) target = $region52
        $region51: #{tpu_custom_call.1} parent=11 // pred_region
          _
        $region52: #{tpu_custom_call.1} parent=11 // pred_fallthru
          _
        // Predicated region
        $region53: #{tpu_custom_call.1} parent=11 // pred_check
          %p472 = pneg %p327
        $region54: #{tpu_custom_call.1} parent=11 // pred_check_branch
          %474 = sbr.rel (%p472) target = $region56
        $region55: #{tpu_custom_call.1} parent=11 // pred_region
          %476 = vsyncadd [#allocation10], 0
          %s477 = sshll.u32 %s12, 4
          %s478 = int_to_ptr.hbm [resolvable:$true] %s477
          %s479 = sshll.u32 [#allocation9], 4
          %s480 = int_to_ptr.vmem [resolvable:$true] %s479
          %485 = dma.hbm_to_vmem [thread:$0]  %s478, 512, %s480, [#allocation10], 128, 128, 8
        $region56: #{tpu_custom_call.1} parent=11 // pred_fallthru
          _
        // Predicated region
        $region57: #{tpu_custom_call.1} parent=11 // pred_check
          %p486 = pneg %p348
        $region58: #{tpu_custom_call.1} parent=11 // pred_check_branch
          %488 = sbr.rel (%p486) target = $region60
        $region59: #{tpu_custom_call.1} parent=11 // pred_region
          _
        $region60: #{tpu_custom_call.1} parent=11 // pred_fallthru
          _
        // Predicated region
        $region61: #{tpu_custom_call.1} parent=11 // pred_check
          %p489 = pneg %p369
        $region62: #{tpu_custom_call.1} parent=11 // pred_check_branch
          %491 = sbr.rel (%p489) target = $region64
        $region63: #{tpu_custom_call.1} parent=11 // pred_region
          _
        $region64: #{tpu_custom_call.1} parent=11 // pred_fallthru
          _
        // Predicated region
        $region65: #{tpu_custom_call.1} parent=11 // pred_check
          %p492 = pneg %p390
        $region66: #{tpu_custom_call.1} parent=11 // pred_check_branch
          %494 = sbr.rel (%p492) target = $region68
        $region67: #{tpu_custom_call.1} parent=11 // pred_region
          _
        $region68: #{tpu_custom_call.1} parent=11 // pred_fallthru
          _
      $region12: #{tpu_custom_call.1} parent=5 // pred_fallthru
        _
      %p495 = scmp.lt.s32.totalorder %s32, 2
      // Predicated region
      $region69: #{tpu_custom_call.1} parent=5 // pred_check
        %p496 = pneg %p495
      $region70: #{tpu_custom_call.1} parent=5 // pred_check_branch
        %498 = sbr.rel (%p496) target = $region72
      $region71: #{tpu_custom_call.1} parent=5 // pred_region
        // Predicated region
        $region73: #{tpu_custom_call.1} parent=71 // pred_check
          %p499 = pneg %p64
        $region74: #{tpu_custom_call.1} parent=71 // pred_check_branch
          %501 = sbr.rel (%p499) target = $region76
        $region75: #{tpu_custom_call.1} parent=71 // pred_region
          %s502 = sand.u32 %s54, 1
          %s503 = scalar_lea.sflag [#allocation4], %s502
          %s504 = sand.u32 %s54, 1
          %s505 = smul.addr %s504, 8
          %s506 = scalar_lea.vmem [#allocation3], %s505
          %508 = vsyncadd %s503, 0
          %s509 = smul.addr %s39, 8
          %s510 = scalar_lea.hbm %s0, %s509
          %s512 = sshll.u32 %s510, 4
          %s513 = int_to_ptr.hbm [resolvable:$true] %s512
          %s514 = sshll.u32 %s506, 4
          %s515 = int_to_ptr.vmem [resolvable:$true] %s514
          %517 = dma.hbm_to_vmem [thread:$0]  %s513, 128, %s515, %s503
        $region76: #{tpu_custom_call.1} parent=71 // pred_fallthru
          _
        // Predicated region
        $region77: #{tpu_custom_call.1} parent=71 // pred_check
          %p518 = pneg %p90
        $region78: #{tpu_custom_call.1} parent=71 // pred_check_branch
          %520 = sbr.rel (%p518) target = $region80
        $region79: #{tpu_custom_call.1} parent=71 // pred_region
          %s521 = sand.u32 %s32, 1
          %s522 = scalar_lea.sflag [#allocation7], %s521
          %s523 = sand.u32 %s80, 1
          %s524 = scalar_lea.vmem [#allocation6], %s523
          %526 = vsyncadd %s522, 0
          %s527 = scalar_lea.hbm %s1, %s39
          %s529 = sshll.u32 %s527, 4
          %s530 = int_to_ptr.hbm [resolvable:$true] %s529
          %s531 = sshll.u32 %s524, 4
          %s532 = int_to_ptr.vmem [resolvable:$true] %s531
          %534 = dma.hbm_to_vmem [thread:$0]  %s530, 16, %s532, %s522
        $region80: #{tpu_custom_call.1} parent=71 // pred_fallthru
          _
      $region72: #{tpu_custom_call.1} parent=5 // pred_fallthru
        _
      %p535 = scmp.le.s32.totalorder 1, %s32
      %p536 = scmp.lt.s32.totalorder %s32, 3
      %p537 = pnand %p535, %p536
      %p538 = pneg %p537
      // Predicated region
      $region81: #{tpu_custom_call.1} parent=5 // pred_check
        _
      $region82: #{tpu_custom_call.1} parent=5 // pred_check_branch
        %540 = sbr.rel (%p537) target = $region84
      $region83: #{tpu_custom_call.1} parent=5 // pred_region
        %s541 = ssub.s32 %s32, 1
        %s542 = sand.u32 %s57, 1
        %s543 = scalar_lea.sflag [#allocation4], %s542
        %s544 = sand.u32 %s57, 1
        %s545 = smul.addr %s544, 8
        %s546 = scalar_lea.vmem [#allocation3], %s545
        // Predicated region
        $region85: #{tpu_custom_call.1} parent=83 // pred_check
          %p547 = pneg %p70
        $region86: #{tpu_custom_call.1} parent=83 // pred_check_branch
          %549 = sbr.rel (%p547) target = $region88
        $region87: #{tpu_custom_call.1} parent=83 // pred_region
          %551 = dma.done %s543, 128
        $region88: #{tpu_custom_call.1} parent=83 // pred_fallthru
          _
        %s552 = sand.u32 %s37, 1
        %s553 = scalar_lea.sflag [#allocation7], %s552
        %s554 = sand.u32 %s83, 1
        %s555 = scalar_lea.vmem [#allocation6], %s554
        // Predicated region
        $region89: #{tpu_custom_call.1} parent=83 // pred_check
          %p556 = pneg %p96
        $region90: #{tpu_custom_call.1} parent=83 // pred_check_branch
          %558 = sbr.rel (%p556) target = $region92
        $region91: #{tpu_custom_call.1} parent=83 // pred_region
          %560 = dma.done %s553, 16
        $region92: #{tpu_custom_call.1} parent=83 // pred_fallthru
          _
        // Predicated region
        $region93: #{tpu_custom_call.1} parent=83 // pred_check
          %p561 = pneg %p138
        $region94: #{tpu_custom_call.1} parent=83 // pred_check_branch
          %563 = sbr.rel (%p561) target = $region96
        $region95: #{tpu_custom_call.1} parent=83 // pred_region
          %565 = dma.done [#allocation7], 16
        $region96: #{tpu_custom_call.1} parent=83 // pred_fallthru
          _
        // Predicated region
        $region97: #{tpu_custom_call.1} parent=83 // pred_check
          %p566 = pneg %p327
        $region98: #{tpu_custom_call.1} parent=83 // pred_check_branch
          %568 = sbr.rel (%p566) target = $region100
        $region99: #{tpu_custom_call.1} parent=83 // pred_region
          %570 = dma.done [#allocation10], 512
        $region100: #{tpu_custom_call.1} parent=83 // pred_fallthru
          _
        %s571 = sand.u32 %s57, 1
        %s572 = scalar_lea.sflag [#allocation4], %s571
        %s573 = sand.u32 %s57, 1
        %s574 = smul.addr %s573, 8
        %s575 = scalar_lea.vmem [#allocation3], %s574
        %p576 = pneg %p70
        %p577 = pneg %p67
        %s578 = sand.u32 %s37, 1
        %s579 = scalar_lea.sflag [#allocation7], %s578
        %s580 = sand.u32 %s83, 1
        %s581 = scalar_lea.vmem [#allocation6], %s580
        %p582 = pneg %p96
        %p583 = pneg %p93
        %p584 = pneg %p117
        %p585 = pneg %p114
        %p586 = pneg %p138
        %p587 = pneg %p135
        %p588 = pneg %p159
        %p589 = pneg %p156
        %p590 = pneg %p180
        %p591 = pneg %p177
        %p592 = pneg %p201
        %p593 = pneg %p198
        %p594 = pneg %p222
        %p595 = pneg %p219
        %p596 = pneg %p243
        %p597 = pneg %p240
        %p598 = pneg %p264
        %p599 = pneg %p261
        %p600 = pneg %p285
        %p601 = pneg %p282
        %p602 = pneg %p306
        %p603 = pneg %p303
        %p604 = pneg %p327
        %p605 = pneg %p324
        %p606 = pneg %p348
        %p607 = pneg %p345
        %p608 = pneg %p369
        %p609 = pneg %p366
        %p610 = pneg %p390
        %p611 = pneg %p387
        %p612 = pneg %p418
        %p613 = pneg %p415
        %s614 = sand.u32 %s405, 1
        %s615 = scalar_lea.sflag [#allocation5], %s614
        %s616 = sand.u32 %s405, 1
        %s617 = smul.addr %s616, 8
        %s618 = scalar_lea.vmem [#allocation11], %s617
        %v619 = vld [vmem:[%s546] sm:$0xff]
        %v620 = vld [vmem:[%s2] sm:$0x1]
        %v621 = vld [vmem:[#allocation8] sm:$0x1]
        %vm622 = vcmask 261120
        %v623 = vsel %vm622, %v619, 0.0
        %624 = vadd.xlane.f32.xlu0 %v623
        %v625 = vpop.xlane.xlu0 %624
        %v626 = vrcp.pop 32.0
        %v627 = vmul.f32 32.0, %v626
        %v628 = vsub.f32 1.0, %v627
        %v629 = vmul.f32 %v626, %v628
        %v630 = vadd.f32 %v626, %v629
        %vm631 = vweird.f32 %v626
        %v632 = vsel %vm631, %v626, %v630
        %v633 = vmul.f32 %v625, %v632
        %v634 = vmul.f32 %v619, %v619
        %v635 = vsel %vm622, %v634, 0.0
        %636 = vadd.xlane.f32.xlu0 %v635
        %v637 = vpop.xlane.xlu0 %636
        %v638 = vmul.f32 %v637, %v632
        %v639 = vmul.f32 %v633, %v633
        %v640 = vsub.f32 %v638, %v639
        %v641 = vsub.f32 %v619, %v633
        %v642 = vadd.f32 %v640, 1e-05
        %v643 = vrsqrt.pop %v642
        %v644 = vmul.f32 %v643, %v642
        %v645 = vmul.f32 %v644, %v643
        %v646 = vmul.f32 0.5, %v645
        %v647 = vsub.f32 1.5, %v646
        %v648 = vmul.f32 %v643, %v647
        %vm649 = vweird.f32 %v642
        %vm650 = vweird.f32 %v643
        %vm651 = vmor %vm649, %vm650
        %v652 = vsel %vm651, %v643, %v648
        %v653 = vmul.f32 %v641, %v652
        %v655 = vperm.slane %v620, 0
        %v657 = vmul.f32 %v653, %v655
        %v659 = vperm.slane %v621, 0
        %v661 = vadd.f32 %v657, %v659
        %v662 = vld [vmem:[%s6] sm:$0xff]
        %v663 = vld [vmem:[%s6 + $0x8] sm:$0xff]
        %v664 = vld [vmem:[%s6 + $0x10] sm:$0xff]
        %v665 = vld [vmem:[%s6 + $0x18] sm:$0xff]
        %v666 = vld [vmem:[%s7] sm:$0x1]
        %v668 = vperm.slane %v666, 0
        %v671 = vsel %vm622, %v661, 0
        %673 = vmatpush.msra.mxu0 0.0
        %674 = vmatpush.msra.mxu0 0.0
        %675 = vmatpush.msra.mxu0 0.0
        %676 = vmatpush.msra.mxu0 0.0
        %677 = vmatpush.msra.mxu0 0.0
        %678 = vmatpush.msra.mxu0 0.0
        %679 = vmatpush.msra.mxu0 0.0
        %680 = vmatpush.msra.mxu0 0.0
        %681 = vmatpush.msra.mxu0 0.0
        %682 = vmatpush.msra.mxu0 0.0
        %683 = vmatpush.msra.mxu0 0.0
        %684 = vmatpush.msra.mxu0 0.0
        %685 = vmatpush.msra.mxu0 %v665
        %686 = vmatpush.msra.mxu0 %v664
        %687 = vmatpush.msra.mxu0 %v663
        %688 = vmatpush.msra.mxu0 %v662
        %689 = vmatmul.f32.gmra.mxu0 %v671
        %v690 = vpop.f32.mrf.mxu0
        %v691 = vadd.f32 %v668, %v690
        %692 = vdwg.mxu0
        %v693 = vld [vmem:[%s4] sm:$0xff]
        %v694 = vld [vmem:[%s4 + $0x8] sm:$0xff]
        %v695 = vld [vmem:[%s4 + $0x10] sm:$0xff]
        %v696 = vld [vmem:[%s4 + $0x18] sm:$0xff]
        %v697 = vld [vmem:[%s5] sm:$0x1]
        %v699 = vperm.slane %v697, 0
        %701 = vmatpush.msra.mxu0 0.0
        %702 = vmatpush.msra.mxu0 0.0
        %703 = vmatpush.msra.mxu0 0.0
        %704 = vmatpush.msra.mxu0 0.0
        %705 = vmatpush.msra.mxu0 0.0
        %706 = vmatpush.msra.mxu0 0.0
        %707 = vmatpush.msra.mxu0 0.0
        %708 = vmatpush.msra.mxu0 0.0
        %709 = vmatpush.msra.mxu0 0.0
        %710 = vmatpush.msra.mxu0 0.0
        %711 = vmatpush.msra.mxu0 0.0
        %712 = vmatpush.msra.mxu0 0.0
        %713 = vmatpush.msra.mxu0 %v696
        %714 = vmatpush.msra.mxu0 %v695
        %715 = vmatpush.msra.mxu0 %v694
        %716 = vmatpush.msra.mxu0 %v693
        %717 = vmatmul.f32.gmra.mxu0 %v671
        %v718 = vpop.f32.mrf.mxu0
        %v719 = vadd.f32 %v699, %v718
        %720 = vdwg.mxu0
        %v721 = vmul.f32 %v719, 0.35355338
        %723 = vrot.lane.b32.xlu0 %v721, 120
        %v724 = vpop.permute.xlu0 %723
        %725 = vrot.lane.b32.xlu0 %v721, 112
        %v726 = vpop.permute.xlu0 %725
        %727 = vrot.lane.b32.xlu0 %v721, 104
        %v728 = vpop.permute.xlu0 %727
        %730 = vrot.lane.b32.xlu0 %v691, 120
        %v731 = vpop.permute.xlu0 %730
        %732 = vrot.lane.b32.xlu0 %v691, 112
        %v733 = vpop.permute.xlu0 %732
        %734 = vrot.lane.b32.xlu0 %v691, 104
        %v735 = vpop.permute.xlu0 %734
        %vm736 = vcmask 64512
        %v737 = vsel %vm736, %v721, 0
        %v739 = vsel %vm736, %v691, 0
        %741 = vmatpush.xpose.msra.mxu0 0.0
        %742 = vmatpush.xpose.msra.mxu0 0.0
        %743 = vmatpush.xpose.msra.mxu0 0.0
        %744 = vmatpush.xpose.msra.mxu0 0.0
        %745 = vmatpush.xpose.msra.mxu0 0.0
        %746 = vmatpush.xpose.msra.mxu0 0.0
        %747 = vmatpush.xpose.msra.mxu0 0.0
        %748 = vmatpush.xpose.msra.mxu0 0.0
        %749 = vmatpush.xpose.msra.mxu0 0.0
        %750 = vmatpush.xpose.msra.mxu0 0.0
        %751 = vmatpush.xpose.msra.mxu0 0.0
        %752 = vmatpush.xpose.msra.mxu0 0.0
        %753 = vmatpush.xpose.msra.mxu0 0.0
        %754 = vmatpush.xpose.msra.mxu0 0.0
        %755 = vmatpush.xpose.msra.mxu0 0.0
        %756 = vmatpush.xpose.msra.mxu0 %v739
        %757 = vmatmul.f32.gmra.mxu0 %v737
        %v758 = vpop.f32.mrf.mxu0
        %v759 = vadd.f32 0.0, %v758
        %760 = vdwg.mxu0
        %v761 = vsel %vm736, %v724, 0
        %v763 = vsel %vm736, %v731, 0
        %765 = vmatpush.xpose.msra.mxu0 0.0
        %766 = vmatpush.xpose.msra.mxu0 0.0
        %767 = vmatpush.xpose.msra.mxu0 0.0
        %768 = vmatpush.xpose.msra.mxu0 0.0
        %769 = vmatpush.xpose.msra.mxu0 0.0
        %770 = vmatpush.xpose.msra.mxu0 0.0
        %771 = vmatpush.xpose.msra.mxu0 0.0
        %772 = vmatpush.xpose.msra.mxu0 0.0
        %773 = vmatpush.xpose.msra.mxu0 0.0
        %774 = vmatpush.xpose.msra.mxu0 0.0
        %775 = vmatpush.xpose.msra.mxu0 0.0
        %776 = vmatpush.xpose.msra.mxu0 0.0
        %777 = vmatpush.xpose.msra.mxu0 0.0
        %778 = vmatpush.xpose.msra.mxu0 0.0
        %779 = vmatpush.xpose.msra.mxu0 0.0
        %780 = vmatpush.xpose.msra.mxu0 %v763
        %781 = vmatmul.f32.gmra.mxu0 %v761
        %v782 = vpop.f32.mrf.mxu0
        %v783 = vadd.f32 0.0, %v782
        %784 = vdwg.mxu0
        %v785 = vsel %vm736, %v726, 0
        %v787 = vsel %vm736, %v733, 0
        %789 = vmatpush.xpose.msra.mxu0 0.0
        %790 = vmatpush.xpose.msra.mxu0 0.0
        %791 = vmatpush.xpose.msra.mxu0 0.0
        %792 = vmatpush.xpose.msra.mxu0 0.0
        %793 = vmatpush.xpose.msra.mxu0 0.0
        %794 = vmatpush.xpose.msra.mxu0 0.0
        %795 = vmatpush.xpose.msra.mxu0 0.0
        %796 = vmatpush.xpose.msra.mxu0 0.0
        %797 = vmatpush.xpose.msra.mxu0 0.0
        %798 = vmatpush.xpose.msra.mxu0 0.0
        %799 = vmatpush.xpose.msra.mxu0 0.0
        %800 = vmatpush.xpose.msra.mxu0 0.0
        %801 = vmatpush.xpose.msra.mxu0 0.0
        %802 = vmatpush.xpose.msra.mxu0 0.0
        %803 = vmatpush.xpose.msra.mxu0 0.0
        %804 = vmatpush.xpose.msra.mxu0 %v787
        %805 = vmatmul.f32.gmra.mxu0 %v785
        %v806 = vpop.f32.mrf.mxu0
        %v807 = vadd.f32 0.0, %v806
        %808 = vdwg.mxu0
        %v809 = vsel %vm736, %v728, 0
        %v811 = vsel %vm736, %v735, 0
        %813 = vmatpush.xpose.msra.mxu0 0.0
        %814 = vmatpush.xpose.msra.mxu0 0.0
        %815 = vmatpush.xpose.msra.mxu0 0.0
        %816 = vmatpush.xpose.msra.mxu0 0.0
        %817 = vmatpush.xpose.msra.mxu0 0.0
        %818 = vmatpush.xpose.msra.mxu0 0.0
        %819 = vmatpush.xpose.msra.mxu0 0.0
        %820 = vmatpush.xpose.msra.mxu0 0.0
        %821 = vmatpush.xpose.msra.mxu0 0.0
        %822 = vmatpush.xpose.msra.mxu0 0.0
        %823 = vmatpush.xpose.msra.mxu0 0.0
        %824 = vmatpush.xpose.msra.mxu0 0.0
        %825 = vmatpush.xpose.msra.mxu0 0.0
        %826 = vmatpush.xpose.msra.mxu0 0.0
        %827 = vmatpush.xpose.msra.mxu0 0.0
        %828 = vmatpush.xpose.msra.mxu0 %v811
        %829 = vmatmul.f32.gmra.mxu0 %v809
        %v830 = vpop.f32.mrf.mxu0
        %v831 = vadd.f32 0.0, %v830
        %832 = vdwg.mxu0
        %v833 = vld [vmem:[%s555] sm:$0x1]
        %vm834 = vcmp.gt.f32.partialorder %v833, 0.0
        %v835 = vsel %vm834, 1, 0
        %v836 = vperm.slane %v835, 0
        %vm837 = vcmp.eq.s32.totalorder %v836, 1
        %v838 = vsel %vm837, %v759, -1e+09
        %v839 = vsel %vm837, %v783, -1e+09
        %v840 = vsel %vm837, %v807, -1e+09
        %v841 = vsel %vm837, %v831, -1e+09
        %v842 = vsel %vm736, %v838, -inf
        %843 = vmax.xlane.f32.xlu0 %v842
        %v844 = vpop.xlane.xlu0 %843
        %v845 = vsel %vm736, %v839, -inf
        %846 = vmax.xlane.f32.xlu0 %v845
        %v847 = vpop.xlane.xlu0 %846
        %v848 = vsel %vm736, %v840, -inf
        %849 = vmax.xlane.f32.xlu0 %v848
        %v850 = vpop.xlane.xlu0 %849
        %v851 = vsel %vm736, %v841, -inf
        %852 = vmax.xlane.f32.xlu0 %v851
        %v853 = vpop.xlane.xlu0 %852
        %v854 = vsub.f32 %v838, %v844
        %v855 = vsub.f32 %v839, %v847
        %v856 = vsub.f32 %v840, %v850
        %v857 = vsub.f32 %v841, %v853
        %v858 = vmul.f32 %v854, 1.442695
        %v859 = vpow.pop %v858
        %v860 = vmul.f32 %v855, 1.442695
        %v861 = vpow.pop %v860
        %v862 = vmul.f32 %v856, 1.442695
        %v863 = vpow.pop %v862
        %v864 = vmul.f32 %v857, 1.442695
        %v865 = vpow.pop %v864
        %v866 = vsel %vm736, %v859, 0.0
        %867 = vadd.xlane.f32.xlu0 %v866
        %v868 = vpop.xlane.xlu0 %867
        %v869 = vsel %vm736, %v861, 0.0
        %870 = vadd.xlane.f32.xlu0 %v869
        %v871 = vpop.xlane.xlu0 %870
        %v872 = vsel %vm736, %v863, 0.0
        %873 = vadd.xlane.f32.xlu0 %v872
        %v874 = vpop.xlane.xlu0 %873
        %v875 = vsel %vm736, %v865, 0.0
        %876 = vadd.xlane.f32.xlu0 %v875
        %v877 = vpop.xlane.xlu0 %876
        %v878 = vrcp.pop %v868
        %v879 = vrcp.pop %v871
        %v880 = vrcp.pop %v874
        %v881 = vrcp.pop %v877
        %v882 = vmul.f32 %v859, %v878
        %v883 = vmul.f32 %v861, %v879
        %v884 = vmul.f32 %v863, %v880
        %v885 = vmul.f32 %v865, %v881
        %886 = vrot.lane.b32.xlu0 %v691, 96
        %v887 = vpop.permute.xlu0 %886
        %v890 = vsel %vm736, %v882, 0
        %892 = vmatpush.msra.mxu0 0.0
        %893 = vmatpush.msra.mxu0 0.0
        %894 = vmatpush.msra.mxu0 0.0
        %895 = vmatpush.msra.mxu0 0.0
        %896 = vmatpush.msra.mxu0 0.0
        %897 = vmatpush.msra.mxu0 0.0
        %898 = vmatpush.msra.mxu0 0.0
        %899 = vmatpush.msra.mxu0 0.0
        %900 = vmatpush.msra.mxu0 0.0
        %901 = vmatpush.msra.mxu0 0.0
        %902 = vmatpush.msra.mxu0 0.0
        %903 = vmatpush.msra.mxu0 0.0
        %904 = vmatpush.msra.mxu0 0.0
        %905 = vmatpush.msra.mxu0 0.0
        %906 = vmatpush.msra.mxu0 0.0
        %907 = vmatpush.msra.mxu0 %v887
        %908 = vmatmul.f32.gmra.mxu0 %v890
        %v909 = vpop.f32.mrf.mxu0
        %v910 = vadd.f32 0.0, %v909
        %911 = vdwg.mxu0
        %912 = vrot.lane.b32.xlu0 %v731, 96
        %v913 = vpop.permute.xlu0 %912
        %v916 = vsel %vm736, %v883, 0
        %918 = vmatpush.msra.mxu0 0.0
        %919 = vmatpush.msra.mxu0 0.0
        %920 = vmatpush.msra.mxu0 0.0
        %921 = vmatpush.msra.mxu0 0.0
        %922 = vmatpush.msra.mxu0 0.0
        %923 = vmatpush.msra.mxu0 0.0
        %924 = vmatpush.msra.mxu0 0.0
        %925 = vmatpush.msra.mxu0 0.0
        %926 = vmatpush.msra.mxu0 0.0
        %927 = vmatpush.msra.mxu0 0.0
        %928 = vmatpush.msra.mxu0 0.0
        %929 = vmatpush.msra.mxu0 0.0
        %930 = vmatpush.msra.mxu0 0.0
        %931 = vmatpush.msra.mxu0 0.0
        %932 = vmatpush.msra.mxu0 0.0
        %933 = vmatpush.msra.mxu0 %v913
        %934 = vmatmul.f32.gmra.mxu0 %v916
        %v935 = vpop.f32.mrf.mxu0
        %v936 = vadd.f32 0.0, %v935
        %937 = vdwg.mxu0
        %938 = vrot.lane.b32.xlu0 %v733, 96
        %v939 = vpop.permute.xlu0 %938
        %v942 = vsel %vm736, %v884, 0
        %944 = vmatpush.msra.mxu0 0.0
        %945 = vmatpush.msra.mxu0 0.0
        %946 = vmatpush.msra.mxu0 0.0
        %947 = vmatpush.msra.mxu0 0.0
        %948 = vmatpush.msra.mxu0 0.0
        %949 = vmatpush.msra.mxu0 0.0
        %950 = vmatpush.msra.mxu0 0.0
        %951 = vmatpush.msra.mxu0 0.0
        %952 = vmatpush.msra.mxu0 0.0
        %953 = vmatpush.msra.mxu0 0.0
        %954 = vmatpush.msra.mxu0 0.0
        %955 = vmatpush.msra.mxu0 0.0
        %956 = vmatpush.msra.mxu0 0.0
        %957 = vmatpush.msra.mxu0 0.0
        %958 = vmatpush.msra.mxu0 0.0
        %959 = vmatpush.msra.mxu0 %v939
        %960 = vmatmul.f32.gmra.mxu0 %v942
        %v961 = vpop.f32.mrf.mxu0
        %v962 = vadd.f32 0.0, %v961
        %963 = vdwg.mxu0
        %964 = vrot.lane.b32.xlu0 %v735, 96
        %v965 = vpop.permute.xlu0 %964
        %v968 = vsel %vm736, %v885, 0
        %970 = vmatpush.msra.mxu0 0.0
        %971 = vmatpush.msra.mxu0 0.0
        %972 = vmatpush.msra.mxu0 0.0
        %973 = vmatpush.msra.mxu0 0.0
        %974 = vmatpush.msra.mxu0 0.0
        %975 = vmatpush.msra.mxu0 0.0
        %976 = vmatpush.msra.mxu0 0.0
        %977 = vmatpush.msra.mxu0 0.0
        %978 = vmatpush.msra.mxu0 0.0
        %979 = vmatpush.msra.mxu0 0.0
        %980 = vmatpush.msra.mxu0 0.0
        %981 = vmatpush.msra.mxu0 0.0
        %982 = vmatpush.msra.mxu0 0.0
        %983 = vmatpush.msra.mxu0 0.0
        %984 = vmatpush.msra.mxu0 0.0
        %985 = vmatpush.msra.mxu0 %v965
        %986 = vmatmul.f32.gmra.mxu0 %v968
        %v987 = vpop.f32.mrf.mxu0
        %v988 = vadd.f32 0.0, %v987
        %989 = vdwg.mxu0
        %990 = vst.msk [vmem:[#allocation2] sm:$0xff] %vm736, %v910
        %992 = vrot.lane.b32.xlu0 %v936, 8
        %v993 = vpop.permute.xlu0 %992
        %vm995 = vcmask 130112
        %996 = vst.msk [vmem:[#allocation2] sm:$0xff] %vm995, %v993
        %998 = vrot.lane.b32.xlu0 %v962, 16
        %v999 = vpop.permute.xlu0 %998
        %vm1001 = vcmask 195712
        %1002 = vst.msk [vmem:[#allocation2] sm:$0xff] %vm1001, %v999
        %1004 = vrot.lane.b32.xlu0 %v988, 24
        %v1005 = vpop.permute.xlu0 %1004
        %vm1007 = vcmask 261312
        %1008 = vst.msk [vmem:[#allocation2] sm:$0xff] %vm1007, %v1005
        %v1009 = vld [vmem:[#allocation2] sm:$0xff]
        %v1010 = vld [vmem:[%s8] sm:$0xff]
        %v1011 = vld [vmem:[%s8 + $0x8] sm:$0xff]
        %v1012 = vld [vmem:[%s8 + $0x10] sm:$0xff]
        %v1013 = vld [vmem:[%s8 + $0x18] sm:$0xff]
        %v1014 = vld [vmem:[%s9] sm:$0x1]
        %v1016 = vperm.slane %v1014, 0
        %v1019 = vsel %vm622, %v1009, 0
        %1021 = vmatpush.msra.mxu0 0.0
        %1022 = vmatpush.msra.mxu0 0.0
        %1023 = vmatpush.msra.mxu0 0.0
        %1024 = vmatpush.msra.mxu0 0.0
        %1025 = vmatpush.msra.mxu0 0.0
        %1026 = vmatpush.msra.mxu0 0.0
        %1027 = vmatpush.msra.mxu0 0.0
        %1028 = vmatpush.msra.mxu0 0.0
        %1029 = vmatpush.msra.mxu0 0.0
        %1030 = vmatpush.msra.mxu0 0.0
        %1031 = vmatpush.msra.mxu0 0.0
        %1032 = vmatpush.msra.mxu0 0.0
        %1033 = vmatpush.msra.mxu0 %v1013
        %1034 = vmatpush.msra.mxu0 %v1012
        %1035 = vmatpush.msra.mxu0 %v1011
        %1036 = vmatpush.msra.mxu0 %v1010
        %1037 = vmatmul.f32.gmra.mxu0 %v1019
        %v1038 = vpop.f32.mrf.mxu0
        %v1039 = vadd.f32 %v1016, %v1038
        %1040 = vdwg.mxu0
        %v1041 = vadd.f32 %v619, %v1039
        %v1042 = vld [vmem:[%s10] sm:$0x1]
        %v1043 = vld [vmem:[%s11] sm:$0x1]
        %v1044 = vsel %vm622, %v1041, 0.0
        %1045 = vadd.xlane.f32.xlu0 %v1044
        %v1046 = vpop.xlane.xlu0 %1045
        %v1047 = vmul.f32 %v1046, %v632
        %v1048 = vmul.f32 %v1041, %v1041
        %v1049 = vsel %vm622, %v1048, 0.0
        %1050 = vadd.xlane.f32.xlu0 %v1049
        %v1051 = vpop.xlane.xlu0 %1050
        %v1052 = vmul.f32 %v1051, %v632
        %v1053 = vmul.f32 %v1047, %v1047
        %v1054 = vsub.f32 %v1052, %v1053
        %v1055 = vsub.f32 %v1041, %v1047
        %v1056 = vadd.f32 %v1054, 1e-05
        %v1057 = vrsqrt.pop %v1056
        %v1058 = vmul.f32 %v1057, %v1056
        %v1059 = vmul.f32 %v1058, %v1057
        %v1060 = vmul.f32 0.5, %v1059
        %v1061 = vsub.f32 1.5, %v1060
        %v1062 = vmul.f32 %v1057, %v1061
        %vm1063 = vweird.f32 %v1056
        %vm1064 = vweird.f32 %v1057
        %vm1065 = vmor %vm1063, %vm1064
        %v1066 = vsel %vm1065, %v1057, %v1062
        %v1067 = vmul.f32 %v1055, %v1066
        %v1069 = vperm.slane %v1042, 0
        %v1071 = vmul.f32 %v1067, %v1069
        %v1073 = vperm.slane %v1043, 0
        %v1075 = vadd.f32 %v1071, %v1073
        %v1076 = vld [vmem:[#allocation9] sm:$0xff]
        %v1077 = vld [vmem:[#allocation9 + $0x8] sm:$0xff]
        %v1078 = vld [vmem:[#allocation9 + $0x10] sm:$0xff]
        %v1079 = vld [vmem:[#allocation9 + $0x18] sm:$0xff]
        %v1080 = vld [vmem:[%s13] sm:$0x1]
        %v1082 = vperm.slane %v1080, 0
        %v1085 = vsel %vm622, %v1075, 0
        %1087 = vmatpush.msra.mxu0 0.0
        %1088 = vmatpush.msra.mxu0 0.0
        %1089 = vmatpush.msra.mxu0 0.0
        %1090 = vmatpush.msra.mxu0 0.0
        %1091 = vmatpush.msra.mxu0 0.0
        %1092 = vmatpush.msra.mxu0 0.0
        %1093 = vmatpush.msra.mxu0 0.0
        %1094 = vmatpush.msra.mxu0 0.0
        %1095 = vmatpush.msra.mxu0 0.0
        %1096 = vmatpush.msra.mxu0 0.0
        %1097 = vmatpush.msra.mxu0 0.0
        %1098 = vmatpush.msra.mxu0 0.0
        %1099 = vmatpush.msra.mxu0 %v1079
        %1100 = vmatpush.msra.mxu0 %v1078
        %1101 = vmatpush.msra.mxu0 %v1077
        %1102 = vmatpush.msra.mxu0 %v1076
        %1103 = vmatmul.f32.gmra.mxu0 %v1085
        %v1104 = vpop.f32.mrf.mxu0
        %v1105 = vadd.f32 %v1082, %v1104
        %1106 = vdwg.mxu0
        %v1107 = vmax.f32 %v1105, 0.0
        %v1108 = vld [vmem:[%s14] sm:$0xff]
        %v1109 = vld [vmem:[%s14 + $0x8] sm:$0xff]
        %v1110 = vld [vmem:[%s14 + $0x10] sm:$0xff]
        %v1111 = vld [vmem:[%s14 + $0x18] sm:$0xff]
        %v1112 = vld [vmem:[%s14 + $0x20] sm:$0xff]
        %v1113 = vld [vmem:[%s14 + $0x28] sm:$0xff]
        %v1114 = vld [vmem:[%s14 + $0x30] sm:$0xff]
        %v1115 = vld [vmem:[%s14 + $0x38] sm:$0xff]
        %v1116 = vld [vmem:[%s15] sm:$0x1]
        %v1118 = vperm.slane %v1116, 0
        %vm1120 = vcmask 523264
        %v1122 = vsel %vm1120, %v1107, 0
        %1124 = vmatpush.msra.mxu0 0.0
        %1125 = vmatpush.msra.mxu0 0.0
        %1126 = vmatpush.msra.mxu0 0.0
        %1127 = vmatpush.msra.mxu0 0.0
        %1128 = vmatpush.msra.mxu0 0.0
        %1129 = vmatpush.msra.mxu0 0.0
        %1130 = vmatpush.msra.mxu0 0.0
        %1131 = vmatpush.msra.mxu0 0.0
        %1132 = vmatpush.msra.mxu0 %v1115
        %1133 = vmatpush.msra.mxu0 %v1114
        %1134 = vmatpush.msra.mxu0 %v1113
        %1135 = vmatpush.msra.mxu0 %v1112
        %1136 = vmatpush.msra.mxu0 %v1111
        %1137 = vmatpush.msra.mxu0 %v1110
        %1138 = vmatpush.msra.mxu0 %v1109
        %1139 = vmatpush.msra.mxu0 %v1108
        %1140 = vmatmul.f32.gmra.mxu0 %v1122
        %v1141 = vpop.f32.mrf.mxu0
        %v1142 = vadd.f32 %v1118, %v1141
        %1143 = vdwg.mxu0
        %v1144 = vadd.f32 %v1041, %v1142
        %1145 = vst.msk [vmem:[%s618] sm:$0xff] %vm622, %v1144
        %s1146 = sand.u32 %s405, 1
        %s1147 = scalar_lea.sflag [#allocation5], %s1146
        %s1148 = sand.u32 %s405, 1
        %s1149 = smul.addr %s1148, 8
        %s1150 = scalar_lea.vmem [#allocation11], %s1149
        // Predicated region
        $region101: #{tpu_custom_call.1} parent=83 // pred_check
          %p1151 = pneg %p415
        $region102: #{tpu_custom_call.1} parent=83 // pred_check_branch
          %1153 = sbr.rel (%p1151) target = $region104
        $region103: #{tpu_custom_call.1} parent=83 // pred_region
          %1155 = vsyncadd %s1147, 0
          %s1156 = sadd.s32 %s42, %s41
          %s1157 = smul.addr %s1156, 8
          %s1158 = scalar_lea.hbm %s16, %s1157
          %s1160 = sshll.u32 %s1150, 4
          %s1161 = int_to_ptr.vmem [resolvable:$true] %s1160
          %s1162 = sshll.u32 %s1158, 4
          %s1163 = int_to_ptr.hbm [resolvable:$true] %s1162
          %1165 = dma.vmem_to_hbm [thread:$0]  %s1161, 128, %s1163, %s1147
        $region104: #{tpu_custom_call.1} parent=83 // pred_fallthru
          _
      $region84: #{tpu_custom_call.1} parent=5 // pred_fallthru
        _
      %p1166 = scmp.le.s32.totalorder 2, %s32
      // Predicated region
      $region105: #{tpu_custom_call.1} parent=5 // pred_check
        %p1167 = pneg %p1166
      $region106: #{tpu_custom_call.1} parent=5 // pred_check_branch
        %1169 = sbr.rel (%p1167) target = $region108
      $region107: #{tpu_custom_call.1} parent=5 // pred_region
        %s1170 = ssub.s32 %s32, 2
        // Predicated region
        $region109: #{tpu_custom_call.1} parent=107 // pred_check
          %p1171 = pneg %p421
        $region110: #{tpu_custom_call.1} parent=107 // pred_check_branch
          %1173 = sbr.rel (%p1171) target = $region112
        $region111: #{tpu_custom_call.1} parent=107 // pred_region
          %s1174 = sand.u32 %s406, 1
          %s1175 = scalar_lea.sflag [#allocation5], %s1174
          %s1176 = sand.u32 %s406, 1
          %s1177 = smul.addr %s1176, 8
          %s1178 = scalar_lea.vmem [#allocation11], %s1177
          %1180 = dma.done %s1175, 128
        $region112: #{tpu_custom_call.1} parent=107 // pred_fallthru
          _
      $region108: #{tpu_custom_call.1} parent=5 // pred_fallthru
        _
    $region6: #{tpu_custom_call.1} parent=1 // loop_footer
      %s36 = sadd.s32 1, %s32
    $region7: #{tpu_custom_call.1} parent=1 // loop_footer_branch
      %31 = sbr.rel target = $region3
    $region8: #{tpu_custom_call.1} parent=1 // loop_exit
      _
    %1181 = vsyncpa [#allocation4], 1
    %s1182 = scalar_lea.sflag [#allocation4], 1
    %1183 = vsyncpa %s1182, 1
    %1184 = vsyncpa [#allocation7], 1
    %s1185 = scalar_lea.sflag [#allocation7], 1
    %1186 = vsyncpa %s1185, 1
    %1187 = vsyncpa [#allocation10], 1
    %1188 = vsyncpa [#allocation5], 1
    %s1189 = scalar_lea.sflag [#allocation5], 1
    %1190 = vsyncpa %s1189, 1

</llo_original>
